<compile_context>
chip_gen: v7x
topology: tpu7x:2x2x1
jax: 0.10.0
libtpu: 0.0.40
codegen_flags: <defaults>
</compile_context>

<pallas_src>
from functools import partial

import jax
import jax.numpy as jnp
from jax import lax
from jax.experimental import pallas as pl
from jax.experimental.pallas import tpu as pltpu


# ----------------------------------------------------------------------------
# Pallas kernel
# ----------------------------------------------------------------------------
def _ffn_kernel(x_ref, ln_w_ref, ln_b_ref, wup_ref, wdown_ref, o_ref, *,
                hidden_dim, split_up):
    x = x_ref[...].astype(jnp.float32)                       # (tm, D) f32

    # LayerNorm statistics in f32.
    mu = jnp.mean(x, axis=-1, keepdims=True)
    var = jnp.mean((x - mu) ** 2, axis=-1, keepdims=True)
    xn = (x - mu) * lax.rsqrt(var + 1e-5) * ln_w_ref[...] + ln_b_ref[...]
    xn = xn.astype(jnp.bfloat16)

    H = hidden_dim
    if split_up:
        # Large H: two lane-aligned matmuls, SwiGLU fused in between so the
        # peak live f32 intermediate is (tm, H), not (tm, 2H).
        gate = jnp.dot(xn, wup_ref[:, H:], preferred_element_type=jnp.float32)
        sgate = gate * jax.nn.sigmoid(gate)                  # silu, f32
        a = jnp.dot(xn, wup_ref[:, :H], preferred_element_type=jnp.float32)
        h = a * sgate
    else:
        # Small H: single wide matmul keeps the MXU pipeline full.
        up = jnp.dot(xn, wup_ref[...], preferred_element_type=jnp.float32)
        a = up[:, :H]
        gate = up[:, H:]
        h = a * (gate * jax.nn.sigmoid(gate))

    # TODO(synk): nn.Dropout omitted (eval-mode identity); a training path
    # would need pltpu.prng_seed / pltpu.prng_random_bits masks.

    y = jnp.dot(h.astype(jnp.bfloat16), wdown_ref[...],
                preferred_element_type=jnp.float32)          # (tm, D) f32
    o_ref[...] = y.astype(o_ref.dtype)


# ----------------------------------------------------------------------------
# Wrapper
# ----------------------------------------------------------------------------
def _round_up(n, m):
    return pl.cdiv(n, m) * m


def feedforward_forward(x, params, *, hidden_dim, tm=256):
    """x: (..., D).  params: ln_w/ln_b (1, D), wup (D, 2H), wdown (H, D)."""
    orig_shape = x.shape
    D = x.shape[-1]
    H = hidden_dim
    assert D % 128 == 0 and H % 128 == 0, "dim / hidden_dim must be lane-aligned"

    x2d = x.reshape(-1, D)                 # native dtype; no f32 round-trip
    T = x2d.shape[0]

    # Row tile: multiple of 128, not (much) larger than the row count, and
    # preferably giving >=2 grid tiles so both v7x TensorCores get work.
    tm_eff = max(128, min(tm, _round_up(T, 128)))
    if T > 128 and pl.cdiv(T, tm_eff) < 2:
        tm_eff = max(128, _round_up(pl.cdiv(T, 2), 128))
    grid_m = pl.cdiv(T, tm_eff)            # ragged last tile handled by masking

    ln_w = params["ln_w"].astype(jnp.float32).reshape(1, D)
    ln_b = params["ln_b"].astype(jnp.float32).reshape(1, D)
    wup = params["wup"].astype(jnp.bfloat16)
    wdown = params["wdown"].astype(jnp.bfloat16)

    # Split the up projection once the f32 (tm, 2H) intermediate gets large.
    split_up = tm_eff * 2 * H * 4 > (8 << 20)

    # Generation-aware VMEM budget (~85% of per-core VMEM).
    try:
        vmem_cap = int(pltpu.get_tpu_info().vmem_capacity_bytes)
    except Exception:  # pragma: no cover - conservative fallback
        vmem_cap = 64 << 20
    act_itemsize = jnp.dtype(x.dtype).itemsize
    act_tiles = 2 * 2 * tm_eff * D * act_itemsize            # x + out, 2-buffered
    weight_bytes = (D * 2 * H + H * D) * 2 * 2               # bf16, worst case 2-buf
    inter_bytes = tm_eff * 2 * H * 4 + 2 * tm_eff * D * 4    # up/a/gate/h + xn/x
    vmem_limit = min(
        max(int(1.5 * (act_tiles + weight_bytes + inter_bytes)) + (8 << 20),
            32 << 20),
        int(vmem_cap * 0.85))

    kernel = partial(_ffn_kernel, hidden_dim=H, split_up=split_up)

    def _const_spec(arr, single_buffer):
        nd = arr.ndim
        idx = lambda i, _nd=nd: (0,) * _nd
        if single_buffer and hasattr(pl, "Buffered"):
            # Grid-invariant operand: double-buffering is wasted VMEM.
            return pl.BlockSpec(arr.shape, idx, pipeline_mode=pl.Buffered(1))
        return pl.BlockSpec(arr.shape, idx)

    def _run(single_buffer_weights):
        return pl.pallas_call(
            kernel,
            out_shape=jax.ShapeDtypeStruct((T, D), x.dtype),
            grid_spec=pltpu.PrefetchScalarGridSpec(
                num_scalar_prefetch=0,
                grid=(grid_m,),
                in_specs=[pl.BlockSpec((tm_eff, D), lambda i: (i, 0)),
                          _const_spec(ln_w, single_buffer_weights),
                          _const_spec(ln_b, single_buffer_weights),
                          _const_spec(wup, single_buffer_weights),
                          _const_spec(wdown, single_buffer_weights)],
                out_specs=pl.BlockSpec((tm_eff, D), lambda i: (i, 0)),
            ),
            compiler_params=pltpu.CompilerParams(
                dimension_semantics=("parallel",),
                vmem_limit_bytes=vmem_limit),
        )(x2d, ln_w, ln_b, wup, wdown)

    try:
        out = _run(True)
    except Exception:
        # Older JAX / lowerings without pipeline_mode support: default buffering.
        out = _run(False)

    return out.reshape(orig_shape)


# ----------------------------------------------------------------------------
# Pure-JAX reference (f32 end-to-end) for verification
# ----------------------------------------------------------------------------
def feedforward_ref(x, params, *, hidden_dim):
    def ln(v, w, b):
        mu = jnp.mean(v, axis=-1, keepdims=True)
        var = jnp.mean((v - mu) ** 2, axis=-1, keepdims=True)
        return (v - mu) * lax.rsqrt(var + 1e-5) * w + b

    xn = ln(x.astype(jnp.float32), params["ln_w"], params["ln_b"])
    up = jnp.einsum("...d,df->...f", xn, params["wup"])
    a, gate = up[..., :hidden_dim], up[..., hidden_dim:]
    h = a * (gate * jax.nn.sigmoid(gate))
    return jnp.einsum("...h,hd->...d", h, params["wdown"])


# ----------------------------------------------------------------------------
# Main
# ----------------------------------------------------------------------------
if __name__ == "__main__":
    N, S = 2, 80       # T = 160 rows -> exercises the ragged (masked) last tile
    D = 128            # dim (multiple of 128 -> lane-dense tiles)
    hidden_dim = 256   # multiple of 128 -> lane-aligned SwiGLU split

    key = jax.random.PRNGKey(0)
    ks = jax.random.split(key, 5)

    # NOTE: the PyTorch module zero-inits `down`; small random values are used
    # here so the full compute path is actually exercised.
    params = {
        "ln_w": 1.0 + 0.1 * jax.random.normal(ks[0], (1, D), jnp.float32),
        "ln_b": 0.1 * jax.random.normal(ks[1], (1, D), jnp.float32),
        "wup": 0.05 * jax.random.normal(ks[2], (D, 2 * hidden_dim), jnp.float32),
        "wdown": 0.05 * jax.random.normal(ks[3], (hidden_dim, D), jnp.float32),
    }

    x = jax.random.normal(ks[4], (N, S, D), jnp.float32)

    out = jax.block_until_ready(
        feedforward_forward(x, params, hidden_dim=hidden_dim))
    ref = feedforward_ref(x, params, hidden_dim=hidden_dim)

    assert out.shape == x.shape and out.dtype == x.dtype
    max_err = float(jnp.max(jnp.abs(out.astype(jnp.float32) - ref)))
    assert max_err < 1e-2, f"mismatch vs reference: {max_err}"
    print("KERNEL_OK")
</pallas_src>

<mosaic_0001>
module attributes {stable_mosaic.version = 11 : i64} {
  func.func @_ffn_kernel(%arg0: i32, %arg1: memref<128x128xf32, #tpu.memory_space<vmem>>, %arg2: memref<1x128xf32, #tpu.memory_space<vmem>>, %arg3: memref<1x128xf32, #tpu.memory_space<vmem>>, %arg4: memref<128x512xbf16, #tpu.memory_space<vmem>>, %arg5: memref<256x128xbf16, #tpu.memory_space<vmem>>, %arg6: memref<128x128xf32, #tpu.memory_space<vmem>>) attributes {dimension_semantics = [#tpu.dimension_semantics<parallel>], iteration_bounds = array<i64: 2>, scalar_prefetch = 0 : i64, scratch_operands = 0 : i64, tpu.core_type = #tpu.core_type<tc>, window_params = [{transform_indices = @transform_0, window_bounds = array<i64: 128, 128>}, {pipeline_mode = #tpu.pipeline_mode<synchronous>, transform_indices = @transform_1, window_bounds = array<i64: 1, 128>}, {pipeline_mode = #tpu.pipeline_mode<synchronous>, transform_indices = @transform_2, window_bounds = array<i64: 1, 128>}, {pipeline_mode = #tpu.pipeline_mode<synchronous>, transform_indices = @transform_3, window_bounds = array<i64: 128, 512>}, {pipeline_mode = #tpu.pipeline_mode<synchronous>, transform_indices = @transform_4, window_bounds = array<i64: 256, 128>}, {transform_indices = @transform_5, window_bounds = array<i64: 128, 128>}]} {
    %c0 = arith.constant 0 : index
    %c0_0 = arith.constant 0 : index
    %0 = vector.load %arg1[%c0, %c0_0] : memref<128x128xf32, #tpu.memory_space<vmem>>, vector<128x128xf32>
    %cst = arith.constant dense<0.000000e+00> : vector<128xf32>
    %1 = vector.multi_reduction <add>, %0, %cst [1] : vector<128x128xf32> to vector<128xf32>
    %2 = vector.shape_cast %1 : vector<128xf32> to vector<128x1xf32>
    %cst_1 = arith.constant 1.280000e+02 : f32
    %3 = vector.broadcast %cst_1 : f32 to vector<128x1xf32>
    %4 = arith.divf %2, %3 : vector<128x1xf32>
    %5 = vector.broadcast %4 : vector<128x1xf32> to vector<128x128xf32>
    %6 = arith.subf %0, %5 : vector<128x128xf32>
    %7 = arith.mulf %6, %6 : vector<128x128xf32>
    %cst_2 = arith.constant dense<0.000000e+00> : vector<128xf32>
    %8 = vector.multi_reduction <add>, %7, %cst_2 [1] : vector<128x128xf32> to vector<128xf32>
    %9 = vector.shape_cast %8 : vector<128xf32> to vector<128x1xf32>
    %cst_3 = arith.constant 1.280000e+02 : f32
    %10 = vector.broadcast %cst_3 : f32 to vector<128x1xf32>
    %11 = arith.divf %9, %10 : vector<128x1xf32>
    %12 = vector.broadcast %4 : vector<128x1xf32> to vector<128x128xf32>
    %13 = arith.subf %0, %12 : vector<128x128xf32>
    %cst_4 = arith.constant 9.99999974E-6 : f32
    %14 = vector.broadcast %cst_4 : f32 to vector<128x1xf32>
    %15 = arith.addf %11, %14 : vector<128x1xf32>
    %16 = math.rsqrt %15 : vector<128x1xf32>
    %17 = vector.broadcast %16 : vector<128x1xf32> to vector<128x128xf32>
    %18 = arith.mulf %13, %17 : vector<128x128xf32>
    %c0_5 = arith.constant 0 : index
    %c0_6 = arith.constant 0 : index
    %19 = vector.load %arg2[%c0_5, %c0_6] : memref<1x128xf32, #tpu.memory_space<vmem>>, vector<1x128xf32>
    %20 = vector.broadcast %19 : vector<1x128xf32> to vector<128x128xf32>
    %21 = arith.mulf %18, %20 : vector<128x128xf32>
    %c0_7 = arith.constant 0 : index
    %c0_8 = arith.constant 0 : index
    %22 = vector.load %arg3[%c0_7, %c0_8] : memref<1x128xf32, #tpu.memory_space<vmem>>, vector<1x128xf32>
    %23 = vector.broadcast %22 : vector<1x128xf32> to vector<128x128xf32>
    %24 = arith.addf %21, %23 : vector<128x128xf32>
    %25 = arith.truncf %24 : vector<128x128xf32> to vector<128x128xbf16>
    %c0_9 = arith.constant 0 : index
    %c0_10 = arith.constant 0 : index
    %26 = vector.load %arg4[%c0_9, %c0_10] : memref<128x512xbf16, #tpu.memory_space<vmem>>, vector<128x512xbf16>
    %cst_11 = arith.constant dense<0.000000e+00> : vector<128x512xf32>
    %27 = tpu.matmul %25, %26, %cst_11 {dimension_numbers = #tpu.dot_dimension_numbers<[1], [0], [0], [1], [0, 0, 1, 1], [], []>} : vector<128x128xbf16>, vector<128x512xbf16>, vector<128x512xf32> -> vector<128x512xf32>
    %28 = vector.extract_strided_slice %27 {offsets = [0, 0], sizes = [128, 256], strides = [1, 1]} : vector<128x512xf32> to vector<128x256xf32>
    %29 = vector.extract_strided_slice %27 {offsets = [0, 256], sizes = [128, 256], strides = [1, 1]} : vector<128x512xf32> to vector<128x256xf32>
    %30 = arith.negf %29 : vector<128x256xf32>
    %31 = math.exp %30 : vector<128x256xf32>
    %cst_12 = arith.constant 1.000000e+00 : f32
    %32 = vector.broadcast %cst_12 : f32 to vector<128x256xf32>
    %33 = arith.addf %32, %31 : vector<128x256xf32>
    %34 = arith.divf %32, %33 : vector<128x256xf32>
    %35 = arith.mulf %29, %34 : vector<128x256xf32>
    %36 = arith.mulf %28, %35 : vector<128x256xf32>
    %37 = arith.truncf %36 : vector<128x256xf32> to vector<128x256xbf16>
    %c0_13 = arith.constant 0 : index
    %c0_14 = arith.constant 0 : index
    %38 = vector.load %arg5[%c0_13, %c0_14] : memref<256x128xbf16, #tpu.memory_space<vmem>>, vector<256x128xbf16>
    %cst_15 = arith.constant dense<0.000000e+00> : vector<128x128xf32>
    %39 = tpu.matmul %37, %38, %cst_15 {dimension_numbers = #tpu.dot_dimension_numbers<[1], [0], [0], [1], [0, 0, 1, 1], [], []>} : vector<128x256xbf16>, vector<256x128xbf16>, vector<128x128xf32> -> vector<128x128xf32>
    %c0_16 = arith.constant 0 : index
    %c0_17 = arith.constant 0 : index
    %40 = vector.load %arg6[%c0_16, %c0_17] : memref<128x128xf32, #tpu.memory_space<vmem>>, vector<128x128xf32>
    tpu.vector_store %arg6[%c0_16, %c0_17], %39 {strides = array<i32>} : memref<128x128xf32, #tpu.memory_space<vmem>>, vector<128x128xf32>,
    return
  }
  func.func @transform_0(%arg0: i32) -> (i32, i32) {
    %c0_i32 = arith.constant 0 : i32
    %c0_i32_0 = arith.constant 0 : i32
    return %arg0, %c0_i32 : i32, i32
  }
  func.func @transform_1(%arg0: i32) -> (i32, i32) {
    %c0_i32 = arith.constant 0 : i32
    %c0_i32_0 = arith.constant 0 : i32
    %c0_i32_1 = arith.constant 0 : i32
    return %c0_i32, %c0_i32_0 : i32, i32
  }
  func.func @transform_2(%arg0: i32) -> (i32, i32) {
    %c0_i32 = arith.constant 0 : i32
    %c0_i32_0 = arith.constant 0 : i32
    %c0_i32_1 = arith.constant 0 : i32
    return %c0_i32, %c0_i32_0 : i32, i32
  }
  func.func @transform_3(%arg0: i32) -> (i32, i32) {
    %c0_i32 = arith.constant 0 : i32
    %c0_i32_0 = arith.constant 0 : i32
    %c0_i32_1 = arith.constant 0 : i32
    return %c0_i32, %c0_i32_0 : i32, i32
  }
  func.func @transform_4(%arg0: i32) -> (i32, i32) {
    %c0_i32 = arith.constant 0 : i32
    %c0_i32_0 = arith.constant 0 : i32
    %c0_i32_1 = arith.constant 0 : i32
    return %c0_i32, %c0_i32_0 : i32, i32
  }
  func.func @transform_5(%arg0: i32) -> (i32, i32) {
    %c0_i32 = arith.constant 0 : i32
    %c0_i32_0 = arith.constant 0 : i32
    return %arg0, %c0_i32 : i32, i32
  }
}

module attributes {stable_mosaic.version = 11 : i64} {
  func.func @_ffn_kernel(%arg0: i32, %arg1: memref<128x128xf32, #tpu.memory_space<vmem>>, %arg2: memref<1x128xf32, #tpu.memory_space<vmem>>, %arg3: memref<1x128xf32, #tpu.memory_space<vmem>>, %arg4: memref<128x512xbf16, #tpu.memory_space<vmem>>, %arg5: memref<256x128xbf16, #tpu.memory_space<vmem>>, %arg6: memref<128x128xf32, #tpu.memory_space<vmem>>) attributes {dimension_semantics = [#tpu.dimension_semantics<parallel>], iteration_bounds = array<i64: 2>, scalar_prefetch = 0 : i64, scratch_operands = 0 : i64, tpu.core_type = #tpu.core_type<tc>, window_params = [{transform_indices = @transform_0, window_bounds = array<i64: 128, 128>}, {pipeline_mode = #tpu.pipeline_mode<synchronous>, transform_indices = @transform_1, window_bounds = array<i64: 1, 128>}, {pipeline_mode = #tpu.pipeline_mode<synchronous>, transform_indices = @transform_2, window_bounds = array<i64: 1, 128>}, {pipeline_mode = #tpu.pipeline_mode<synchronous>, transform_indices = @transform_3, window_bounds = array<i64: 128, 512>}, {pipeline_mode = #tpu.pipeline_mode<synchronous>, transform_indices = @transform_4, window_bounds = array<i64: 256, 128>}, {transform_indices = @transform_5, window_bounds = array<i64: 128, 128>}]} {
    %c0 = arith.constant 0 : index
    %c0_0 = arith.constant 0 : index
    %0 = vector.load %arg1[%c0, %c0_0] : memref<128x128xf32, #tpu.memory_space<vmem>>, vector<128x128xf32>
    %cst = arith.constant dense<0.000000e+00> : vector<128xf32>
    %1 = vector.multi_reduction <add>, %0, %cst [1] : vector<128x128xf32> to vector<128xf32>
    %2 = vector.shape_cast %1 : vector<128xf32> to vector<128x1xf32>
    %cst_1 = arith.constant 1.280000e+02 : f32
    %3 = vector.broadcast %cst_1 : f32 to vector<128x1xf32>
    %4 = arith.divf %2, %3 : vector<128x1xf32>
    %5 = vector.broadcast %4 : vector<128x1xf32> to vector<128x128xf32>
    %6 = arith.subf %0, %5 : vector<128x128xf32>
    %7 = arith.mulf %6, %6 : vector<128x128xf32>
    %cst_2 = arith.constant dense<0.000000e+00> : vector<128xf32>
    %8 = vector.multi_reduction <add>, %7, %cst_2 [1] : vector<128x128xf32> to vector<128xf32>
    %9 = vector.shape_cast %8 : vector<128xf32> to vector<128x1xf32>
    %cst_3 = arith.constant 1.280000e+02 : f32
    %10 = vector.broadcast %cst_3 : f32 to vector<128x1xf32>
    %11 = arith.divf %9, %10 : vector<128x1xf32>
    %12 = vector.broadcast %4 : vector<128x1xf32> to vector<128x128xf32>
    %13 = arith.subf %0, %12 : vector<128x128xf32>
    %cst_4 = arith.constant 9.99999974E-6 : f32
    %14 = vector.broadcast %cst_4 : f32 to vector<128x1xf32>
    %15 = arith.addf %11, %14 : vector<128x1xf32>
    %16 = math.rsqrt %15 : vector<128x1xf32>
    %17 = vector.broadcast %16 : vector<128x1xf32> to vector<128x128xf32>
    %18 = arith.mulf %13, %17 : vector<128x128xf32>
    %c0_5 = arith.constant 0 : index
    %c0_6 = arith.constant 0 : index
    %19 = vector.load %arg2[%c0_5, %c0_6] : memref<1x128xf32, #tpu.memory_space<vmem>>, vector<1x128xf32>
    %20 = vector.broadcast %19 : vector<1x128xf32> to vector<128x128xf32>
    %21 = arith.mulf %18, %20 : vector<128x128xf32>
    %c0_7 = arith.constant 0 : index
    %c0_8 = arith.constant 0 : index
    %22 = vector.load %arg3[%c0_7, %c0_8] : memref<1x128xf32, #tpu.memory_space<vmem>>, vector<1x128xf32>
    %23 = vector.broadcast %22 : vector<1x128xf32> to vector<128x128xf32>
    %24 = arith.addf %21, %23 : vector<128x128xf32>
    %25 = arith.truncf %24 : vector<128x128xf32> to vector<128x128xbf16>
    %c0_9 = arith.constant 0 : index
    %c0_10 = arith.constant 0 : index
    %26 = vector.load %arg4[%c0_9, %c0_10] : memref<128x512xbf16, #tpu.memory_space<vmem>>, vector<128x512xbf16>
    %cst_11 = arith.constant dense<0.000000e+00> : vector<128x512xf32>
    %27 = tpu.matmul %25, %26, %cst_11 {dimension_numbers = #tpu.dot_dimension_numbers<[1], [0], [0], [1], [0, 0, 1, 1], [], []>} : vector<128x128xbf16>, vector<128x512xbf16>, vector<128x512xf32> -> vector<128x512xf32>
    %28 = vector.extract_strided_slice %27 {offsets = [0, 0], sizes = [128, 256], strides = [1, 1]} : vector<128x512xf32> to vector<128x256xf32>
    %29 = vector.extract_strided_slice %27 {offsets = [0, 256], sizes = [128, 256], strides = [1, 1]} : vector<128x512xf32> to vector<128x256xf32>
    %30 = arith.negf %29 : vector<128x256xf32>
    %31 = math.exp %30 : vector<128x256xf32>
    %cst_12 = arith.constant 1.000000e+00 : f32
    %32 = vector.broadcast %cst_12 : f32 to vector<128x256xf32>
    %33 = arith.addf %32, %31 : vector<128x256xf32>
    %34 = arith.divf %32, %33 : vector<128x256xf32>
    %35 = arith.mulf %29, %34 : vector<128x256xf32>
    %36 = arith.mulf %28, %35 : vector<128x256xf32>
    %37 = arith.truncf %36 : vector<128x256xf32> to vector<128x256xbf16>
    %c0_13 = arith.constant 0 : index
    %c0_14 = arith.constant 0 : index
    %38 = vector.load %arg5[%c0_13, %c0_14] : memref<256x128xbf16, #tpu.memory_space<vmem>>, vector<256x128xbf16>
    %cst_15 = arith.constant dense<0.000000e+00> : vector<128x128xf32>
    %39 = tpu.matmul %37, %38, %cst_15 {dimension_numbers = #tpu.dot_dimension_numbers<[1], [0], [0], [1], [0, 0, 1, 1], [], []>} : vector<128x256xbf16>, vector<256x128xbf16>, vector<128x128xf32> -> vector<128x128xf32>
    %c0_16 = arith.constant 0 : index
    %c0_17 = arith.constant 0 : index
    %40 = vector.load %arg6[%c0_16, %c0_17] : memref<128x128xf32, #tpu.memory_space<vmem>>, vector<128x128xf32>
    tpu.vector_store %arg6[%c0_16, %c0_17], %39 {strides = array<i32>} : memref<128x128xf32, #tpu.memory_space<vmem>>, vector<128x128xf32>,
    return
  }
  func.func @transform_0(%arg0: i32) -> (i32, i32) {
    %c0_i32 = arith.constant 0 : i32
    %c0_i32_0 = arith.constant 0 : i32
    return %arg0, %c0_i32 : i32, i32
  }
  func.func @transform_1(%arg0: i32) -> (i32, i32) {
    %c0_i32 = arith.constant 0 : i32
    %c0_i32_0 = arith.constant 0 : i32
    %c0_i32_1 = arith.constant 0 : i32
    return %c0_i32, %c0_i32_0 : i32, i32
  }
  func.func @transform_2(%arg0: i32) -> (i32, i32) {
    %c0_i32 = arith.constant 0 : i32
    %c0_i32_0 = arith.constant 0 : i32
    %c0_i32_1 = arith.constant 0 : i32
    return %c0_i32, %c0_i32_0 : i32, i32
  }
  func.func @transform_3(%arg0: i32) -> (i32, i32) {
    %c0_i32 = arith.constant 0 : i32
    %c0_i32_0 = arith.constant 0 : i32
    %c0_i32_1 = arith.constant 0 : i32
    return %c0_i32, %c0_i32_0 : i32, i32
  }
  func.func @transform_4(%arg0: i32) -> (i32, i32) {
    %c0_i32 = arith.constant 0 : i32
    %c0_i32_0 = arith.constant 0 : i32
    %c0_i32_1 = arith.constant 0 : i32
    return %c0_i32, %c0_i32_0 : i32, i32
  }
  func.func @transform_5(%arg0: i32) -> (i32, i32) {
    %c0_i32 = arith.constant 0 : i32
    %c0_i32_0 = arith.constant 0 : i32
    return %arg0, %c0_i32 : i32, i32
  }
}

</mosaic_0001>

<llo_original>
// kernel: tpu_custom_call.1
$region0: #{tpu_custom_call.1}
  #allocation0 [shape = 'u32[]', space=smem, size = 0x4, offset = 0x4, fixed_abs, tag = 'smem constant byte address 0x4 - core index']
  #allocation1 [shape = 'u32[144,128]{1,0:T(1,128)}', space=vmem, size = 0x12000, scoped, tag = 'internal scratch']
  %s0 = inlined_call_operand.hbm [shape: f32[160,128], index: 0, kind: input, shape index: {}]
  %s1 = inlined_call_operand.vmem [shape: f32[1,128], index: 1, kind: input, shape index: {}]
  %s2 = inlined_call_operand.vmem [shape: f32[1,128], index: 2, kind: input, shape index: {}]
  %s3 = inlined_call_operand.hbm [shape: bf16[128,512], index: 3, kind: input, shape index: {}]
  %s4 = inlined_call_operand.hbm [shape: bf16[256,128], index: 4, kind: input, shape index: {}]
  %s5 = inlined_call_operand.hbm [shape: f32[160,128], index: 5, kind: output, shape index: {}]
  %s6 = sld [smem:[#allocation0]]
  $region65: #{tpu_custom_call.1} parent=0
    _
  %s8 = ssub.s32 1, %s6
  %s9 = scalar_select 0, %s8, %s6
  $region1: #{tpu_custom_call.1} parent=0
    #allocation2 [shape = 'u8[131072]{0}', space=vmem, size = 0x20000, scoped, tag = 'input window, operand 0']
    #allocation3 [shape = 's32[2]{0}', space=sflag, size = 0x8, scoped, tag = 'scoped memory for tpu_custom_call.1']
    #allocation4 [shape = 's32[2]{0}', space=sflag, size = 0x8, scoped, tag = 'scoped memory for tpu_custom_call.1']
    #allocation5 [shape = 'u8[131072]{0}', space=vmem, size = 0x20000, scoped, tag = 'input window, operand 3, single buffered']
    #allocation6 [shape = 's32[1]{0}', space=sflag, size = 0x4, scoped, tag = 'scoped memory for tpu_custom_call.1']
    #allocation7 [shape = 'u8[65536]{0}', space=vmem, size = 0x10000, scoped, tag = 'input window, operand 4, single buffered']
    #allocation8 [shape = 'u8[131072]{0}', space=vmem, size = 0x20000, scoped, tag = 'output window, operand 0']
    %10 = vsyncpa [#allocation3], 0
    %s11 = scalar_lea.sflag [#allocation3], 1
    %12 = vsyncpa %s11, 0
    %13 = vsyncpa [#allocation6], 0
    %14 = vsyncpa [#allocation4], 0
    %s15 = scalar_lea.sflag [#allocation4], 1
    %16 = vsyncpa %s15, 0
    loop: start=0, step=1, limit=4
    $region2: #{tpu_custom_call.1} parent=1 // loop_pre_header
      _
    $region3: #{tpu_custom_call.1} parent=1 // loop_header
      %s18 = sphi 0, %s22
      %p19 = scmp.ge.s32.totalorder %s18, 4
      %s28 = sphi 0, %s30
      %s31 = sphi 0, %s28
      %s32 = sphi 0, %s31
      %s48 = sphi 0, %s32
      %s52 = sphi 0, %s52
      %s54 = sphi 0, %s52
      %s55 = sphi 0, %s54
      %s69 = sphi 0, %s55
      %s73 = sphi 0, %s73
      %s75 = sphi 0, %s73
      %s76 = sphi 0, %s75
      %s90 = sphi 0, %s76
      %s94 = sphi 0, %s94
      %s96 = sphi 0, %s94
      %s97 = sphi 0, %s96
      %s111 = sphi 0, %s97
      %s115 = sphi 0, %s115
      %s117 = sphi 0, %s115
      %s118 = sphi 0, %s117
      %s132 = sphi 0, %s118
      %s138 = sphi 0, %s140
      %s141 = sphi 0, %s138
      %s142 = sphi 0, %s141
      %s158 = sphi 0, %s142
    $region4: #{tpu_custom_call.1} parent=1 // loop_header_branch
      %21 = sbr.rel (%p19) target = $region8
    $region5: #{tpu_custom_call.1} parent=1 // loop_body
      %s23 = ssub.s32 %s18, 1
      %s24 = ssub.s32 %s18, 2
      %s25 = sadd.s32 %s18, 1
      %s26 = ssub.s32 %s18, %s25
      %p27 = scmp.eq.s32.totalorder %s26, 0
      %s29 = sadd.s32 %s28, 1
      %s30 = scalar_select %p27, %s28, %s29
      %p33 = pneg %p27
      %p34 = scmp.eq.s32.totalorder %s18, 1
      %p35 = por %p33, %p34
      %p36 = scmp.ne.s32.totalorder %s28, %s31
      %p37 = scmp.eq.s32.totalorder %s18, 0
      %p38 = por %p36, %p37
      %p39 = scmp.ne.s32.totalorder %s28, %s31
      %p40 = scmp.eq.s32.totalorder %s23, 1
      %p41 = por %p39, %p40
      %p42 = scmp.ne.s32.totalorder %s31, %s32
      %p43 = scmp.eq.s32.totalorder %s23, 0
      %p44 = por %p42, %p43
      %p45 = scmp.ne.s32.totalorder %s31, %s32
      %p46 = scmp.eq.s32.totalorder %s24, 1
      %p47 = por %p45, %p46
      %p49 = scmp.ne.s32.totalorder %s32, %s48
      %p50 = scmp.eq.s32.totalorder %s24, 0
      %p51 = por %p49, %p50
      %s53 = sadd.s32 %s52, 1
      %p56 = scmp.eq.s32.totalorder %s18, 1
      %p57 = scmp.ne.s32.totalorder %s52, %s54
      %p58 = scmp.eq.s32.totalorder %s18, 0
      %p59 = por %p57, %p58
      %p60 = scmp.ne.s32.totalorder %s52, %s54
      %p61 = scmp.eq.s32.totalorder %s23, 1
      %p62 = por %p60, %p61
      %p63 = scmp.ne.s32.totalorder %s54, %s55
      %p64 = scmp.eq.s32.totalorder %s23, 0
      %p65 = por %p63, %p64
      %p66 = scmp.ne.s32.totalorder %s54, %s55
      %p67 = scmp.eq.s32.totalorder %s24, 1
      %p68 = por %p66, %p67
      %p70 = scmp.ne.s32.totalorder %s55, %s69
      %p71 = scmp.eq.s32.totalorder %s24, 0
      %p72 = por %p70, %p71
      %s74 = sadd.s32 %s73, 1
      %p77 = scmp.eq.s32.totalorder %s18, 1
      %p78 = scmp.ne.s32.totalorder %s73, %s75
      %p79 = scmp.eq.s32.totalorder %s18, 0
      %p80 = por %p78, %p79
      %p81 = scmp.ne.s32.totalorder %s73, %s75
      %p82 = scmp.eq.s32.totalorder %s23, 1
      %p83 = por %p81, %p82
      %p84 = scmp.ne.s32.totalorder %s75, %s76
      %p85 = scmp.eq.s32.totalorder %s23, 0
      %p86 = por %p84, %p85
      %p87 = scmp.ne.s32.totalorder %s75, %s76
      %p88 = scmp.eq.s32.totalorder %s24, 1
      %p89 = por %p87, %p88
      %p91 = scmp.ne.s32.totalorder %s76, %s90
      %p92 = scmp.eq.s32.totalorder %s24, 0
      %p93 = por %p91, %p92
      %s95 = sadd.s32 %s94, 1
      %p98 = scmp.eq.s32.totalorder %s18, 1
      %p99 = scmp.ne.s32.totalorder %s94, %s96
      %p100 = scmp.eq.s32.totalorder %s18, 0
      %p101 = por %p99, %p100
      %p102 = scmp.ne.s32.totalorder %s94, %s96
      %p103 = scmp.eq.s32.totalorder %s23, 1
      %p104 = por %p102, %p103
      %p105 = scmp.ne.s32.totalorder %s96, %s97
      %p106 = scmp.eq.s32.totalorder %s23, 0
      %p107 = por %p105, %p106
      %p108 = scmp.ne.s32.totalorder %s96, %s97
      %p109 = scmp.eq.s32.totalorder %s24, 1
      %p110 = por %p108, %p109
      %p112 = scmp.ne.s32.totalorder %s97, %s111
      %p113 = scmp.eq.s32.totalorder %s24, 0
      %p114 = por %p112, %p113
      %s116 = sadd.s32 %s115, 1
      %p119 = scmp.eq.s32.totalorder %s18, 1
      %p120 = scmp.ne.s32.totalorder %s115, %s117
      %p121 = scmp.eq.s32.totalorder %s18, 0
      %p122 = por %p120, %p121
      %p123 = scmp.ne.s32.totalorder %s115, %s117
      %p124 = scmp.eq.s32.totalorder %s23, 1
      %p125 = por %p123, %p124
      %p126 = scmp.ne.s32.totalorder %s117, %s118
      %p127 = scmp.eq.s32.totalorder %s23, 0
      %p128 = por %p126, %p127
      %p129 = scmp.ne.s32.totalorder %s117, %s118
      %p130 = scmp.eq.s32.totalorder %s24, 1
      %p131 = por %p129, %p130
      %p133 = scmp.ne.s32.totalorder %s118, %s132
      %p134 = scmp.eq.s32.totalorder %s24, 0
      %p135 = por %p133, %p134
      %s136 = ssub.s32 %s18, %s25
      %p137 = scmp.eq.s32.totalorder %s136, 0
      %s139 = sadd.s32 %s138, 1
      %s140 = scalar_select %p137, %s138, %s139
      %p143 = pneg %p137
      %p144 = scmp.eq.s32.totalorder %s18, 1
      %p145 = por %p143, %p144
      %p146 = scmp.ne.s32.totalorder %s138, %s141
      %p147 = scmp.eq.s32.totalorder %s18, 0
      %p148 = por %p146, %p147
      %p149 = scmp.ne.s32.totalorder %s138, %s141
      %p150 = scmp.eq.s32.totalorder %s23, 1
      %p151 = por %p149, %p150
      %p152 = scmp.ne.s32.totalorder %s141, %s142
      %p153 = scmp.eq.s32.totalorder %s23, 0
      %p154 = por %p152, %p153
      %p155 = scmp.ne.s32.totalorder %s141, %s142
      %p156 = scmp.eq.s32.totalorder %s24, 1
      %p157 = por %p155, %p156
      %p159 = scmp.ne.s32.totalorder %s142, %s158
      %p160 = scmp.eq.s32.totalorder %s24, 0
      %p161 = por %p159, %p160
      %p162 = scmp.le.s32.totalorder 1, %s18
      %p163 = scmp.lt.s32.totalorder %s18, 3
      %p164 = pnand %p162, %p163
      %p165 = pneg %p164
      // Predicated region
      $region9: #{tpu_custom_call.1} parent=5 // pred_check
        _
      $region10: #{tpu_custom_call.1} parent=5 // pred_check_branch
        %167 = sbr.rel (%p164) target = $region12
      $region11: #{tpu_custom_call.1} parent=5 // pred_region
        %s168 = ssub.s32 %s18, 1
        // Predicated region
        $region13: #{tpu_custom_call.1} parent=11 // pred_check
          %p169 = pneg %p65
        $region14: #{tpu_custom_call.1} parent=11 // pred_check_branch
          %171 = sbr.rel (%p169) target = $region16
        $region15: #{tpu_custom_call.1} parent=11 // pred_region
          _
        $region16: #{tpu_custom_call.1} parent=11 // pred_fallthru
          _
        // Predicated region
        $region17: #{tpu_custom_call.1} parent=11 // pred_check
          %p172 = pneg %p86
        $region18: #{tpu_custom_call.1} parent=11 // pred_check_branch
          %174 = sbr.rel (%p172) target = $region20
        $region19: #{tpu_custom_call.1} parent=11 // pred_region
          _
        $region20: #{tpu_custom_call.1} parent=11 // pred_fallthru
          _
        // Predicated region
        $region21: #{tpu_custom_call.1} parent=11 // pred_check
          %p175 = pneg %p107
        $region22: #{tpu_custom_call.1} parent=11 // pred_check_branch
          %177 = sbr.rel (%p175) target = $region24
        $region23: #{tpu_custom_call.1} parent=11 // pred_region
          %s179 = ssub.s32 4096, 4096
          %180 = vsyncadd [#allocation6], %s179
          %s181 = sshll.u32 [#allocation5], 4
          %s182 = int_to_ptr.vmem [resolvable:$true] %s181
          %187 = dma.hbm_to_vmem [thread:$0]  %s3, 4096, %s182, [#allocation6], 256, 256, 16
        $region24: #{tpu_custom_call.1} parent=11 // pred_fallthru
          _
        // Predicated region
        $region25: #{tpu_custom_call.1} parent=11 // pred_check
          %p188 = pneg %p128
        $region26: #{tpu_custom_call.1} parent=11 // pred_check_branch
          %190 = sbr.rel (%p188) target = $region28
        $region27: #{tpu_custom_call.1} parent=11 // pred_region
          %s192 = ssub.s32 2048, 2048
          %193 = vsyncadd [#allocation6], %s192
          %s194 = sshll.u32 [#allocation7], 4
          %s195 = int_to_ptr.vmem [resolvable:$true] %s194
          %200 = dma.hbm_to_vmem [thread:$0]  %s4, 2048, %s195, [#allocation6], 64, 64, 4
        $region28: #{tpu_custom_call.1} parent=11 // pred_fallthru
          _
      $region12: #{tpu_custom_call.1} parent=5 // pred_fallthru
        _
      %p201 = scmp.lt.s32.totalorder %s18, 2
      // Predicated region
      $region29: #{tpu_custom_call.1} parent=5 // pred_check
        %p202 = pneg %p201
      $region30: #{tpu_custom_call.1} parent=5 // pred_check_branch
        %204 = sbr.rel (%p202) target = $region32
      $region31: #{tpu_custom_call.1} parent=5 // pred_region
        // Predicated region
        $region33: #{tpu_custom_call.1} parent=31 // pred_check
          %p205 = pneg %p38
        $region34: #{tpu_custom_call.1} parent=31 // pred_check_branch
          %207 = sbr.rel (%p205) target = $region36
        $region35: #{tpu_custom_call.1} parent=31 // pred_region
          %s208 = sand.u32 %s28, 1
          %s209 = scalar_lea.sflag [#allocation3], %s208
          %s210 = sand.u32 %s28, 1
          %s211 = smul.addr %s210, 128
          %s212 = scalar_lea.vmem [#allocation2], %s211
          %s213 = smul.u32 16, %s18
          %s214 = ssub.s32 20, %s213
          %p215 = scmp.lt.s32.totalorder %s214, 16
          %s216 = scalar_select %p215, %s214, 16
          %s217 = smul.u32 128, %s216
          %s219 = ssub.s32 2048, %s217
          %220 = vsyncadd %s209, %s219
          %p221 = scmp.ne.s32.totalorder 0, %s217
          %s222 = smul.addr %s213, 128
          %s223 = scalar_lea.hbm %s0, %s222
          %s224 = smul.u32 8, %s216
          %s225 = sshll.u32 %s212, 4
          %s226 = int_to_ptr.vmem [resolvable:$true] %s225
          %s227 = sshll.u32 %s224, 4
          %231 = dma.hbm_to_vmem [thread:$0]  (%p221), %s223, %s227, %s226, %s209, 128, 128, 8
        $region36: #{tpu_custom_call.1} parent=31 // pred_fallthru
          _
      $region32: #{tpu_custom_call.1} parent=5 // pred_fallthru
        _
      %p232 = scmp.le.s32.totalorder 1, %s18
      %p233 = scmp.lt.s32.totalorder %s18, 3
      %p234 = pnand %p232, %p233
      %p235 = pneg %p234
      // Predicated region
      $region37: #{tpu_custom_call.1} parent=5 // pred_check
        _
      $region38: #{tpu_custom_call.1} parent=5 // pred_check_branch
        %237 = sbr.rel (%p234) target = $region40
      $region39: #{tpu_custom_call.1} parent=5 // pred_region
        %s238 = ssub.s32 %s18, 1
        %s239 = sand.u32 %s31, 1
        %s240 = scalar_lea.sflag [#allocation3], %s239
        %s241 = sand.u32 %s31, 1
        %s242 = smul.addr %s241, 128
        %s243 = scalar_lea.vmem [#allocation2], %s242
        // Predicated region
        $region41: #{tpu_custom_call.1} parent=39 // pred_check
          %p244 = pneg %p44
        $region42: #{tpu_custom_call.1} parent=39 // pred_check_branch
          %246 = sbr.rel (%p244) target = $region44
        $region43: #{tpu_custom_call.1} parent=39 // pred_region
          %247 = dma.done %s240, 2048
        $region44: #{tpu_custom_call.1} parent=39 // pred_fallthru
          _
        // Predicated region
        $region45: #{tpu_custom_call.1} parent=39 // pred_check
          %p248 = pneg %p107
        $region46: #{tpu_custom_call.1} parent=39 // pred_check_branch
          %250 = sbr.rel (%p248) target = $region48
        $region47: #{tpu_custom_call.1} parent=39 // pred_region
          %251 = dma.done [#allocation6], 4096
        $region48: #{tpu_custom_call.1} parent=39 // pred_fallthru
          _
        // Predicated region
        $region49: #{tpu_custom_call.1} parent=39 // pred_check
          %p252 = pneg %p128
        $region50: #{tpu_custom_call.1} parent=39 // pred_check_branch
          %254 = sbr.rel (%p252) target = $region52
        $region51: #{tpu_custom_call.1} parent=39 // pred_region
          %255 = dma.done [#allocation6], 2048
        $region52: #{tpu_custom_call.1} parent=39 // pred_fallthru
          _
        %s256 = sand.u32 %s31, 1
        %s257 = scalar_lea.sflag [#allocation3], %s256
        %s258 = sand.u32 %s31, 1
        %s259 = smul.addr %s258, 128
        %s260 = scalar_lea.vmem [#allocation2], %s259
        %p261 = pneg %p44
        %p262 = pneg %p41
        %p263 = pneg %p65
        %p264 = pneg %p62
        %p265 = pneg %p86
        %p266 = pneg %p83
        %p267 = pneg %p107
        %p268 = pneg %p104
        %p269 = pneg %p128
        %p270 = pneg %p125
        %p271 = pneg %p154
        %p272 = pneg %p151
        %s273 = sand.u32 %s141, 1
        %s274 = scalar_lea.sflag [#allocation4], %s273
        %s275 = sand.u32 %s141, 1
        %s276 = smul.addr %s275, 128
        %s277 = scalar_lea.vmem [#allocation8], %s276
        %s278 = smul.u32 16, %s23
        %s279 = ssub.s32 20, %s278
        %p280 = scmp.lt.s32.totalorder %s279, 16
        %s281 = scalar_select %p280, %s279, 16
        %s282 = smul.u32 128, %s281
        %s283 = smul.u32 16, %s23
        %s284 = ssub.s32 20, %s283
        %p285 = scmp.lt.s32.totalorder %s284, 16
        %s286 = scalar_select %p285, %s284, 16
        %s287 = smul.u32 128, %s286
        %v289 = vld [vmem:[%s243] sm:$0xff]
        %v290 = vld [vmem:[%s243 + $0x8] sm:$0xff]
        %v291 = vld [vmem:[%s243 + $0x10] sm:$0xff]
        %v292 = vld [vmem:[%s243 + $0x18] sm:$0xff]
        %v293 = vld [vmem:[%s243 + $0x20] sm:$0xff]
        %v294 = vld [vmem:[%s243 + $0x28] sm:$0xff]
        %v295 = vld [vmem:[%s243 + $0x30] sm:$0xff]
        %v296 = vld [vmem:[%s243 + $0x38] sm:$0xff]
        %v297 = vld [vmem:[%s243 + $0x40] sm:$0xff]
        %v298 = vld [vmem:[%s243 + $0x48] sm:$0xff]
        %v299 = vld [vmem:[%s243 + $0x50] sm:$0xff]
        %v300 = vld [vmem:[%s243 + $0x58] sm:$0xff]
        %v301 = vld [vmem:[%s243 + $0x60] sm:$0xff]
        %v302 = vld [vmem:[%s243 + $0x68] sm:$0xff]
        %v303 = vld [vmem:[%s243 + $0x70] sm:$0xff]
        %v304 = vld [vmem:[%s243 + $0x78] sm:$0xff]
        %305 = vadd.xlane.f32.xlu0 %v289
        %v306 = vpop.xlane.xlu0 %305
        %307 = vadd.xlane.f32.xlu0 %v290
        %v308 = vpop.xlane.xlu0 %307
        %309 = vadd.xlane.f32.xlu0 %v291
        %v310 = vpop.xlane.xlu0 %309
        %311 = vadd.xlane.f32.xlu0 %v292
        %v312 = vpop.xlane.xlu0 %311
        %313 = vadd.xlane.f32.xlu0 %v293
        %v314 = vpop.xlane.xlu0 %313
        %315 = vadd.xlane.f32.xlu0 %v294
        %v316 = vpop.xlane.xlu0 %315
        %317 = vadd.xlane.f32.xlu0 %v295
        %v318 = vpop.xlane.xlu0 %317
        %319 = vadd.xlane.f32.xlu0 %v296
        %v320 = vpop.xlane.xlu0 %319
        %321 = vadd.xlane.f32.xlu0 %v297
        %v322 = vpop.xlane.xlu0 %321
        %323 = vadd.xlane.f32.xlu0 %v298
        %v324 = vpop.xlane.xlu0 %323
        %325 = vadd.xlane.f32.xlu0 %v299
        %v326 = vpop.xlane.xlu0 %325
        %327 = vadd.xlane.f32.xlu0 %v300
        %v328 = vpop.xlane.xlu0 %327
        %329 = vadd.xlane.f32.xlu0 %v301
        %v330 = vpop.xlane.xlu0 %329
        %331 = vadd.xlane.f32.xlu0 %v302
        %v332 = vpop.xlane.xlu0 %331
        %333 = vadd.xlane.f32.xlu0 %v303
        %v334 = vpop.xlane.xlu0 %333
        %335 = vadd.xlane.f32.xlu0 %v304
        %v336 = vpop.xlane.xlu0 %335
        %v337 = vrcp.pop 128.0
        %v338 = vmul.f32 %v306, %v337
        %v339 = vmul.f32 %v308, %v337
        %v340 = vmul.f32 %v310, %v337
        %v341 = vmul.f32 %v312, %v337
        %v342 = vmul.f32 %v314, %v337
        %v343 = vmul.f32 %v316, %v337
        %v344 = vmul.f32 %v318, %v337
        %v345 = vmul.f32 %v320, %v337
        %v346 = vmul.f32 %v322, %v337
        %v347 = vmul.f32 %v324, %v337
        %v348 = vmul.f32 %v326, %v337
        %v349 = vmul.f32 %v328, %v337
        %v350 = vmul.f32 %v330, %v337
        %v351 = vmul.f32 %v332, %v337
        %v352 = vmul.f32 %v334, %v337
        %v353 = vmul.f32 %v336, %v337
        %v354 = vsub.f32 %v289, %v338
        %v355 = vsub.f32 %v290, %v339
        %v356 = vsub.f32 %v291, %v340
        %v357 = vsub.f32 %v292, %v341
        %v358 = vsub.f32 %v293, %v342
        %v359 = vsub.f32 %v294, %v343
        %v360 = vsub.f32 %v295, %v344
        %v361 = vsub.f32 %v296, %v345
        %v362 = vsub.f32 %v297, %v346
        %v363 = vsub.f32 %v298, %v347
        %v364 = vsub.f32 %v299, %v348
        %v365 = vsub.f32 %v300, %v349
        %v366 = vsub.f32 %v301, %v350
        %v367 = vsub.f32 %v302, %v351
        %v368 = vsub.f32 %v303, %v352
        %v369 = vsub.f32 %v304, %v353
        %v370 = vmul.f32 %v354, %v354
        %v371 = vmul.f32 %v355, %v355
        %v372 = vmul.f32 %v356, %v356
        %v373 = vmul.f32 %v357, %v357
        %v374 = vmul.f32 %v358, %v358
        %v375 = vmul.f32 %v359, %v359
        %v376 = vmul.f32 %v360, %v360
        %v377 = vmul.f32 %v361, %v361
        %v378 = vmul.f32 %v362, %v362
        %v379 = vmul.f32 %v363, %v363
        %v380 = vmul.f32 %v364, %v364
        %v381 = vmul.f32 %v365, %v365
        %v382 = vmul.f32 %v366, %v366
        %v383 = vmul.f32 %v367, %v367
        %v384 = vmul.f32 %v368, %v368
        %v385 = vmul.f32 %v369, %v369
        %386 = vadd.xlane.f32.xlu0 %v370
        %v387 = vpop.xlane.xlu0 %386
        %388 = vadd.xlane.f32.xlu0 %v371
        %v389 = vpop.xlane.xlu0 %388
        %390 = vadd.xlane.f32.xlu0 %v372
        %v391 = vpop.xlane.xlu0 %390
        %392 = vadd.xlane.f32.xlu0 %v373
        %v393 = vpop.xlane.xlu0 %392
        %394 = vadd.xlane.f32.xlu0 %v374
        %v395 = vpop.xlane.xlu0 %394
        %396 = vadd.xlane.f32.xlu0 %v375
        %v397 = vpop.xlane.xlu0 %396
        %398 = vadd.xlane.f32.xlu0 %v376
        %v399 = vpop.xlane.xlu0 %398
        %400 = vadd.xlane.f32.xlu0 %v377
        %v401 = vpop.xlane.xlu0 %400
        %402 = vadd.xlane.f32.xlu0 %v378
        %v403 = vpop.xlane.xlu0 %402
        %404 = vadd.xlane.f32.xlu0 %v379
        %v405 = vpop.xlane.xlu0 %404
        %406 = vadd.xlane.f32.xlu0 %v380
        %v407 = vpop.xlane.xlu0 %406
        %408 = vadd.xlane.f32.xlu0 %v381
        %v409 = vpop.xlane.xlu0 %408
        %410 = vadd.xlane.f32.xlu0 %v382
        %v411 = vpop.xlane.xlu0 %410
        %412 = vadd.xlane.f32.xlu0 %v383
        %v413 = vpop.xlane.xlu0 %412
        %414 = vadd.xlane.f32.xlu0 %v384
        %v415 = vpop.xlane.xlu0 %414
        %416 = vadd.xlane.f32.xlu0 %v385
        %v417 = vpop.xlane.xlu0 %416
        %v418 = vmul.f32 %v387, %v337
        %v419 = vmul.f32 %v389, %v337
        %v420 = vmul.f32 %v391, %v337
        %v421 = vmul.f32 %v393, %v337
        %v422 = vmul.f32 %v395, %v337
        %v423 = vmul.f32 %v397, %v337
        %v424 = vmul.f32 %v399, %v337
        %v425 = vmul.f32 %v401, %v337
        %v426 = vmul.f32 %v403, %v337
        %v427 = vmul.f32 %v405, %v337
        %v428 = vmul.f32 %v407, %v337
        %v429 = vmul.f32 %v409, %v337
        %v430 = vmul.f32 %v411, %v337
        %v431 = vmul.f32 %v413, %v337
        %v432 = vmul.f32 %v415, %v337
        %v433 = vmul.f32 %v417, %v337
        %v434 = vadd.f32 %v418, 1e-05
        %v435 = vadd.f32 %v419, 1e-05
        %v436 = vadd.f32 %v420, 1e-05
        %v437 = vadd.f32 %v421, 1e-05
        %v438 = vadd.f32 %v422, 1e-05
        %v439 = vadd.f32 %v423, 1e-05
        %v440 = vadd.f32 %v424, 1e-05
        %v441 = vadd.f32 %v425, 1e-05
        %v442 = vadd.f32 %v426, 1e-05
        %v443 = vadd.f32 %v427, 1e-05
        %v444 = vadd.f32 %v428, 1e-05
        %v445 = vadd.f32 %v429, 1e-05
        %v446 = vadd.f32 %v430, 1e-05
        %v447 = vadd.f32 %v431, 1e-05
        %v448 = vadd.f32 %v432, 1e-05
        %v449 = vadd.f32 %v433, 1e-05
        %v450 = vrsqrt.pop %v434
        %v451 = vrsqrt.pop %v435
        %v452 = vrsqrt.pop %v436
        %v453 = vrsqrt.pop %v437
        %v454 = vrsqrt.pop %v438
        %v455 = vrsqrt.pop %v439
        %v456 = vrsqrt.pop %v440
        %v457 = vrsqrt.pop %v441
        %v458 = vrsqrt.pop %v442
        %v459 = vrsqrt.pop %v443
        %v460 = vrsqrt.pop %v444
        %v461 = vrsqrt.pop %v445
        %v462 = vrsqrt.pop %v446
        %v463 = vrsqrt.pop %v447
        %v464 = vrsqrt.pop %v448
        %v465 = vrsqrt.pop %v449
        %v466 = vmul.f32 %v354, %v450
        %v467 = vmul.f32 %v355, %v451
        %v468 = vmul.f32 %v356, %v452
        %v469 = vmul.f32 %v357, %v453
        %v470 = vmul.f32 %v358, %v454
        %v471 = vmul.f32 %v359, %v455
        %v472 = vmul.f32 %v360, %v456
        %v473 = vmul.f32 %v361, %v457
        %v474 = vmul.f32 %v362, %v458
        %v475 = vmul.f32 %v363, %v459
        %v476 = vmul.f32 %v364, %v460
        %v477 = vmul.f32 %v365, %v461
        %v478 = vmul.f32 %v366, %v462
        %v479 = vmul.f32 %v367, %v463
        %v480 = vmul.f32 %v368, %v464
        %v481 = vmul.f32 %v369, %v465
        %v482 = vld [vmem:[%s1] sm:$0x1]
        %v484 = vlaneseq
        %v485 = vshrl.u32 %v484, 7
        %v486 = vsub.s32 0, %v485
        %v487 = vrot.slane %v482, %v486
        %v489 = vmul.f32 %v466, %v487
        %v490 = vmul.f32 %v467, %v487
        %v491 = vmul.f32 %v468, %v487
        %v492 = vmul.f32 %v469, %v487
        %v493 = vmul.f32 %v470, %v487
        %v494 = vmul.f32 %v471, %v487
        %v495 = vmul.f32 %v472, %v487
        %v496 = vmul.f32 %v473, %v487
        %v497 = vmul.f32 %v474, %v487
        %v498 = vmul.f32 %v475, %v487
        %v499 = vmul.f32 %v476, %v487
        %v500 = vmul.f32 %v477, %v487
        %v501 = vmul.f32 %v478, %v487
        %v502 = vmul.f32 %v479, %v487
        %v503 = vmul.f32 %v480, %v487
        %v504 = vmul.f32 %v481, %v487
        %v505 = vld [vmem:[%s2] sm:$0x1]
        %v507 = vlaneseq
        %v508 = vshrl.u32 %v507, 7
        %v509 = vsub.s32 0, %v508
        %v510 = vrot.slane %v505, %v509
        %v512 = vadd.f32 %v489, %v510
        %v513 = vadd.f32 %v490, %v510
        %v514 = vadd.f32 %v491, %v510
        %v515 = vadd.f32 %v492, %v510
        %v516 = vadd.f32 %v493, %v510
        %v517 = vadd.f32 %v494, %v510
        %v518 = vadd.f32 %v495, %v510
        %v519 = vadd.f32 %v496, %v510
        %v520 = vadd.f32 %v497, %v510
        %v521 = vadd.f32 %v498, %v510
        %v522 = vadd.f32 %v499, %v510
        %v523 = vadd.f32 %v500, %v510
        %v524 = vadd.f32 %v501, %v510
        %v525 = vadd.f32 %v502, %v510
        %v526 = vadd.f32 %v503, %v510
        %v527 = vadd.f32 %v504, %v510
        %v528 = vpack.c.bf16 %v513, %v512
        %v529 = vpack.c.bf16 %v515, %v514
        %v530 = vpack.c.bf16 %v517, %v516
        %v531 = vpack.c.bf16 %v519, %v518
        %v532 = vpack.c.bf16 %v521, %v520
        %v533 = vpack.c.bf16 %v523, %v522
        %v534 = vpack.c.bf16 %v525, %v524
        %v535 = vpack.c.bf16 %v527, %v526
        %v536 = vld [vmem:[#allocation5] sm:$0xff]
        %v537 = vld [vmem:[#allocation5 + $0x8] sm:$0xff]
        %v538 = vld [vmem:[#allocation5 + $0x10] sm:$0xff]
        %v539 = vld [vmem:[#allocation5 + $0x18] sm:$0xff]
        %v540 = vld [vmem:[#allocation5 + $0x20] sm:$0xff]
        %v541 = vld [vmem:[#allocation5 + $0x28] sm:$0xff]
        %v542 = vld [vmem:[#allocation5 + $0x30] sm:$0xff]
        %v543 = vld [vmem:[#allocation5 + $0x38] sm:$0xff]
        %v544 = vld [vmem:[#allocation5 + $0x40] sm:$0xff]
        %v545 = vld [vmem:[#allocation5 + $0x48] sm:$0xff]
        %v546 = vld [vmem:[#allocation5 + $0x50] sm:$0xff]
        %v547 = vld [vmem:[#allocation5 + $0x58] sm:$0xff]
        %v548 = vld [vmem:[#allocation5 + $0x60] sm:$0xff]
        %v549 = vld [vmem:[#allocation5 + $0x68] sm:$0xff]
        %v550 = vld [vmem:[#allocation5 + $0x70] sm:$0xff]
        %v551 = vld [vmem:[#allocation5 + $0x78] sm:$0xff]
        %v552 = vld [vmem:[#allocation5 + $0x80] sm:$0xff]
        %v553 = vld [vmem:[#allocation5 + $0x88] sm:$0xff]
        %v554 = vld [vmem:[#allocation5 + $0x90] sm:$0xff]
        %v555 = vld [vmem:[#allocation5 + $0x98] sm:$0xff]
        %v556 = vld [vmem:[#allocation5 + $0xa0] sm:$0xff]
        %v557 = vld [vmem:[#allocation5 + $0xa8] sm:$0xff]
        %v558 = vld [vmem:[#allocation5 + $0xb0] sm:$0xff]
        %v559 = vld [vmem:[#allocation5 + $0xb8] sm:$0xff]
        %v560 = vld [vmem:[#allocation5 + $0xc0] sm:$0xff]
        %v561 = vld [vmem:[#allocation5 + $0xc8] sm:$0xff]
        %v562 = vld [vmem:[#allocation5 + $0xd0] sm:$0xff]
        %v563 = vld [vmem:[#allocation5 + $0xd8] sm:$0xff]
        %v564 = vld [vmem:[#allocation5 + $0xe0] sm:$0xff]
        %v565 = vld [vmem:[#allocation5 + $0xe8] sm:$0xff]
        %v566 = vld [vmem:[#allocation5 + $0xf0] sm:$0xff]
        %v567 = vld [vmem:[#allocation5 + $0xf8] sm:$0xff]
        %v600 = vunpack.c.l.b16 %v536
        %v601 = vunpack.c.h.b16 %v536
        %v602 = vunpack.c.l.b16 %v537
        %v603 = vunpack.c.h.b16 %v537
        %v604 = vunpack.c.l.b16 %v538
        %v605 = vunpack.c.h.b16 %v538
        %v606 = vunpack.c.l.b16 %v539
        %v607 = vunpack.c.h.b16 %v539
        %v608 = vunpack.c.l.b16 %v540
        %v609 = vunpack.c.h.b16 %v540
        %v610 = vunpack.c.l.b16 %v541
        %v611 = vunpack.c.h.b16 %v541
        %v612 = vunpack.c.l.b16 %v542
        %v613 = vunpack.c.h.b16 %v542
        %v614 = vunpack.c.l.b16 %v543
        %v615 = vunpack.c.h.b16 %v543
        %v616 = vunpack.c.l.b16 %v544
        %v617 = vunpack.c.h.b16 %v544
        %v618 = vunpack.c.l.b16 %v545
        %v619 = vunpack.c.h.b16 %v545
        %v620 = vunpack.c.l.b16 %v546
        %v621 = vunpack.c.h.b16 %v546
        %v622 = vunpack.c.l.b16 %v547
        %v623 = vunpack.c.h.b16 %v547
        %v624 = vunpack.c.l.b16 %v548
        %v625 = vunpack.c.h.b16 %v548
        %v626 = vunpack.c.l.b16 %v549
        %v627 = vunpack.c.h.b16 %v549
        %v628 = vunpack.c.l.b16 %v550
        %v629 = vunpack.c.h.b16 %v550
        %v630 = vunpack.c.l.b16 %v551
        %v631 = vunpack.c.h.b16 %v551
        %v632 = vunpack.c.l.b16 %v552
        %v633 = vunpack.c.h.b16 %v552
        %v634 = vunpack.c.l.b16 %v553
        %v635 = vunpack.c.h.b16 %v553
        %v636 = vunpack.c.l.b16 %v554
        %v637 = vunpack.c.h.b16 %v554
        %v638 = vunpack.c.l.b16 %v555
        %v639 = vunpack.c.h.b16 %v555
        %v640 = vunpack.c.l.b16 %v556
        %v641 = vunpack.c.h.b16 %v556
        %v642 = vunpack.c.l.b16 %v557
        %v643 = vunpack.c.h.b16 %v557
        %v644 = vunpack.c.l.b16 %v558
        %v645 = vunpack.c.h.b16 %v558
        %v646 = vunpack.c.l.b16 %v559
        %v647 = vunpack.c.h.b16 %v559
        %v648 = vunpack.c.l.b16 %v560
        %v649 = vunpack.c.h.b16 %v560
        %v650 = vunpack.c.l.b16 %v561
        %v651 = vunpack.c.h.b16 %v561
        %v652 = vunpack.c.l.b16 %v562
        %v653 = vunpack.c.h.b16 %v562
        %v654 = vunpack.c.l.b16 %v563
        %v655 = vunpack.c.h.b16 %v563
        %v656 = vunpack.c.l.b16 %v564
        %v657 = vunpack.c.h.b16 %v564
        %v658 = vunpack.c.l.b16 %v565
        %v659 = vunpack.c.h.b16 %v565
        %v660 = vunpack.c.l.b16 %v566
        %v661 = vunpack.c.h.b16 %v566
        %v662 = vunpack.c.l.b16 %v567
        %v663 = vunpack.c.h.b16 %v567
        %v664 = vpack.c.b16 %v604, %v600
        %v665 = vpack.c.b16 %v605, %v601
        %v666 = vpack.c.b16 %v606, %v602
        %v667 = vpack.c.b16 %v607, %v603
        %v668 = vpack.c.b16 %v612, %v608
        %v669 = vpack.c.b16 %v613, %v609
        %v670 = vpack.c.b16 %v614, %v610
        %v671 = vpack.c.b16 %v615, %v611
        %v672 = vpack.c.b16 %v620, %v616
        %v673 = vpack.c.b16 %v621, %v617
        %v674 = vpack.c.b16 %v622, %v618
        %v675 = vpack.c.b16 %v623, %v619
        %v676 = vpack.c.b16 %v628, %v624
        %v677 = vpack.c.b16 %v629, %v625
        %v678 = vpack.c.b16 %v630, %v626
        %v679 = vpack.c.b16 %v631, %v627
        %v680 = vpack.c.b16 %v636, %v632
        %v681 = vpack.c.b16 %v637, %v633
        %v682 = vpack.c.b16 %v638, %v634
        %v683 = vpack.c.b16 %v639, %v635
        %v684 = vpack.c.b16 %v644, %v640
        %v685 = vpack.c.b16 %v645, %v641
        %v686 = vpack.c.b16 %v646, %v642
        %v687 = vpack.c.b16 %v647, %v643
        %v688 = vpack.c.b16 %v652, %v648
        %v689 = vpack.c.b16 %v653, %v649
        %v690 = vpack.c.b16 %v654, %v650
        %v691 = vpack.c.b16 %v655, %v651
        %v692 = vpack.c.b16 %v660, %v656
        %v693 = vpack.c.b16 %v661, %v657
        %v694 = vpack.c.b16 %v662, %v658
        %v695 = vpack.c.b16 %v663, %v659
        %728 = vmatprep.subr.bf16.mxu0 %v665
        %729 = vmatpush1.bf16.msra.mxu0 %v664
        %730 = vmatprep.subr.bf16.mxu0 %v669
        %731 = vmatpush1.bf16.msra.mxu0 %v668
        %732 = vmatprep.subr.bf16.mxu0 %v673
        %733 = vmatpush1.bf16.msra.mxu0 %v672
        %734 = vmatprep.subr.bf16.mxu0 %v677
        %735 = vmatpush1.bf16.msra.mxu0 %v676
        %736 = vmatprep.subr.bf16.mxu0 %v681
        %737 = vmatpush1.bf16.msra.mxu0 %v680
        %738 = vmatprep.subr.bf16.mxu0 %v685
        %739 = vmatpush1.bf16.msra.mxu0 %v684
        %740 = vmatprep.subr.bf16.mxu0 %v689
        %741 = vmatpush1.bf16.msra.mxu0 %v688
        %742 = vmatprep.subr.bf16.mxu0 %v693
        %743 = vmatpush1.bf16.msra.mxu0 %v692
        %744 = vmatprep.subr.bf16.mxu0 0
        %745 = vmatpush1.bf16.msra.mxu0 0
        %746 = vmatprep.subr.bf16.mxu0 0
        %747 = vmatpush1.bf16.msra.mxu0 0
        %748 = vmatprep.subr.bf16.mxu0 0
        %749 = vmatpush1.bf16.msra.mxu0 0
        %750 = vmatprep.subr.bf16.mxu0 0
        %751 = vmatpush1.bf16.msra.mxu0 0
        %752 = vmatprep.subr.bf16.mxu0 0
        %753 = vmatpush1.bf16.msra.mxu0 0
        %754 = vmatprep.subr.bf16.mxu0 0
        %755 = vmatpush1.bf16.msra.mxu0 0
        %756 = vmatprep.subr.bf16.mxu0 0
        %757 = vmatpush1.bf16.msra.mxu0 0
        %758 = vmatprep.subr.bf16.mxu0 0
        %759 = vmatpush1.bf16.msra.mxu0 0
        %760 = vmatprep.mubr.bf16.mxu0 0
        %761 = vmatmul.mubr.bf16.gmra.mrb[0].mxu0 %v528
        %v762 = vpop.f32.mrb[0].mxu0
        %v763 = vadd.f32 0.0, %v762
        %v764 = vpop.f32.mrb[0].mxu0
        %v765 = vadd.f32 0.0, %v764
        %v766 = vpop.f32.mrb[0].mxu0
        %v767 = vadd.f32 0.0, %v766
        %v768 = vpop.f32.mrb[0].mxu0
        %v769 = vadd.f32 0.0, %v768
        %770 = vmatprep.mubr.bf16.mxu0 0
        %771 = vmatmul.mubr.bf16.gmra.mrb[0].mxu0 %v529
        %v772 = vpop.f32.mrb[0].mxu0
        %v773 = vadd.f32 0.0, %v772
        %v774 = vpop.f32.mrb[0].mxu0
        %v775 = vadd.f32 0.0, %v774
        %v776 = vpop.f32.mrb[0].mxu0
        %v777 = vadd.f32 0.0, %v776
        %v778 = vpop.f32.mrb[0].mxu0
        %v779 = vadd.f32 0.0, %v778
        %780 = vmatprep.mubr.bf16.mxu0 0
        %781 = vmatmul.mubr.bf16.gmra.mrb[0].mxu0 %v530
        %v782 = vpop.f32.mrb[0].mxu0
        %v783 = vadd.f32 0.0, %v782
        %v784 = vpop.f32.mrb[0].mxu0
        %v785 = vadd.f32 0.0, %v784
        %v786 = vpop.f32.mrb[0].mxu0
        %v787 = vadd.f32 0.0, %v786
        %v788 = vpop.f32.mrb[0].mxu0
        %v789 = vadd.f32 0.0, %v788
        %790 = vmatprep.mubr.bf16.mxu0 0
        %791 = vmatmul.mubr.bf16.gmra.mrb[0].mxu0 %v531
        %v792 = vpop.f32.mrb[0].mxu0
        %v793 = vadd.f32 0.0, %v792
        %v794 = vpop.f32.mrb[0].mxu0
        %v795 = vadd.f32 0.0, %v794
        %v796 = vpop.f32.mrb[0].mxu0
        %v797 = vadd.f32 0.0, %v796
        %v798 = vpop.f32.mrb[0].mxu0
        %v799 = vadd.f32 0.0, %v798
        %800 = vmatprep.mubr.bf16.mxu0 0
        %801 = vmatmul.mubr.bf16.gmra.mrb[0].mxu0 %v532
        %v802 = vpop.f32.mrb[0].mxu0
        %v803 = vadd.f32 0.0, %v802
        %v804 = vpop.f32.mrb[0].mxu0
        %v805 = vadd.f32 0.0, %v804
        %v806 = vpop.f32.mrb[0].mxu0
        %v807 = vadd.f32 0.0, %v806
        %v808 = vpop.f32.mrb[0].mxu0
        %v809 = vadd.f32 0.0, %v808
        %810 = vmatprep.mubr.bf16.mxu0 0
        %811 = vmatmul.mubr.bf16.gmra.mrb[0].mxu0 %v533
        %v812 = vpop.f32.mrb[0].mxu0
        %v813 = vadd.f32 0.0, %v812
        %v814 = vpop.f32.mrb[0].mxu0
        %v815 = vadd.f32 0.0, %v814
        %v816 = vpop.f32.mrb[0].mxu0
        %v817 = vadd.f32 0.0, %v816
        %v818 = vpop.f32.mrb[0].mxu0
        %v819 = vadd.f32 0.0, %v818
        %820 = vmatprep.mubr.bf16.mxu0 0
        %821 = vmatmul.mubr.bf16.gmra.mrb[0].mxu0 %v534
        %v822 = vpop.f32.mrb[0].mxu0
        %v823 = vadd.f32 0.0, %v822
        %v824 = vpop.f32.mrb[0].mxu0
        %v825 = vadd.f32 0.0, %v824
        %v826 = vpop.f32.mrb[0].mxu0
        %v827 = vadd.f32 0.0, %v826
        %v828 = vpop.f32.mrb[0].mxu0
        %v829 = vadd.f32 0.0, %v828
        %830 = vmatprep.mubr.bf16.mxu0 0
        %831 = vmatmul.mubr.bf16.gmra.mrb[0].mxu0 %v535
        %v832 = vpop.f32.mrb[0].mxu0
        %v833 = vadd.f32 0.0, %v832
        %v834 = vpop.f32.mrb[0].mxu0
        %v835 = vadd.f32 0.0, %v834
        %v836 = vpop.f32.mrb[0].mxu0
        %v837 = vadd.f32 0.0, %v836
        %v838 = vpop.f32.mrb[0].mxu0
        %v839 = vadd.f32 0.0, %v838
        %840 = vdwg.mxu0
        %841 = vmatprep.subr.bf16.mxu0 %v667
        %842 = vmatpush1.bf16.msra.mxu0 %v666
        %843 = vmatprep.subr.bf16.mxu0 %v671
        %844 = vmatpush1.bf16.msra.mxu0 %v670
        %845 = vmatprep.subr.bf16.mxu0 %v675
        %846 = vmatpush1.bf16.msra.mxu0 %v674
        %847 = vmatprep.subr.bf16.mxu0 %v679
        %848 = vmatpush1.bf16.msra.mxu0 %v678
        %849 = vmatprep.subr.bf16.mxu0 %v683
        %850 = vmatpush1.bf16.msra.mxu0 %v682
        %851 = vmatprep.subr.bf16.mxu0 %v687
        %852 = vmatpush1.bf16.msra.mxu0 %v686
        %853 = vmatprep.subr.bf16.mxu0 %v691
        %854 = vmatpush1.bf16.msra.mxu0 %v690
        %855 = vmatprep.subr.bf16.mxu0 %v695
        %856 = vmatpush1.bf16.msra.mxu0 %v694
        %857 = vmatprep.subr.bf16.mxu0 0
        %858 = vmatpush1.bf16.msra.mxu0 0
        %859 = vmatprep.subr.bf16.mxu0 0
        %860 = vmatpush1.bf16.msra.mxu0 0
        %861 = vmatprep.subr.bf16.mxu0 0
        %862 = vmatpush1.bf16.msra.mxu0 0
        %863 = vmatprep.subr.bf16.mxu0 0
        %864 = vmatpush1.bf16.msra.mxu0 0
        %865 = vmatprep.subr.bf16.mxu0 0
        %866 = vmatpush1.bf16.msra.mxu0 0
        %867 = vmatprep.subr.bf16.mxu0 0
        %868 = vmatpush1.bf16.msra.mxu0 0
        %869 = vmatprep.subr.bf16.mxu0 0
        %870 = vmatpush1.bf16.msra.mxu0 0
        %871 = vmatprep.subr.bf16.mxu0 0
        %872 = vmatpush1.bf16.msra.mxu0 0
        %873 = vmatprep.mubr.bf16.mxu0 0
        %874 = vmatmul.mubr.bf16.gmra.mrb[0].mxu0 %v528
        %v875 = vpop.f32.mrb[0].mxu0
        %v876 = vadd.f32 0.0, %v875
        %v877 = vpop.f32.mrb[0].mxu0
        %v878 = vadd.f32 0.0, %v877
        %v879 = vpop.f32.mrb[0].mxu0
        %v880 = vadd.f32 0.0, %v879
        %v881 = vpop.f32.mrb[0].mxu0
        %v882 = vadd.f32 0.0, %v881
        %883 = vmatprep.mubr.bf16.mxu0 0
        %884 = vmatmul.mubr.bf16.gmra.mrb[0].mxu0 %v529
        %v885 = vpop.f32.mrb[0].mxu0
        %v886 = vadd.f32 0.0, %v885
        %v887 = vpop.f32.mrb[0].mxu0
        %v888 = vadd.f32 0.0, %v887
        %v889 = vpop.f32.mrb[0].mxu0
        %v890 = vadd.f32 0.0, %v889
        %v891 = vpop.f32.mrb[0].mxu0
        %v892 = vadd.f32 0.0, %v891
        %893 = vmatprep.mubr.bf16.mxu0 0
        %894 = vmatmul.mubr.bf16.gmra.mrb[0].mxu0 %v530
        %v895 = vpop.f32.mrb[0].mxu0
        %v896 = vadd.f32 0.0, %v895
        %v897 = vpop.f32.mrb[0].mxu0
        %v898 = vadd.f32 0.0, %v897
        %v899 = vpop.f32.mrb[0].mxu0
        %v900 = vadd.f32 0.0, %v899
        %v901 = vpop.f32.mrb[0].mxu0
        %v902 = vadd.f32 0.0, %v901
        %903 = vmatprep.mubr.bf16.mxu0 0
        %904 = vmatmul.mubr.bf16.gmra.mrb[0].mxu0 %v531
        %v905 = vpop.f32.mrb[0].mxu0
        %v906 = vadd.f32 0.0, %v905
        %v907 = vpop.f32.mrb[0].mxu0
        %v908 = vadd.f32 0.0, %v907
        %v909 = vpop.f32.mrb[0].mxu0
        %v910 = vadd.f32 0.0, %v909
        %v911 = vpop.f32.mrb[0].mxu0
        %v912 = vadd.f32 0.0, %v911
        %913 = vmatprep.mubr.bf16.mxu0 0
        %914 = vmatmul.mubr.bf16.gmra.mrb[0].mxu0 %v532
        %v915 = vpop.f32.mrb[0].mxu0
        %v916 = vadd.f32 0.0, %v915
        %v917 = vpop.f32.mrb[0].mxu0
        %v918 = vadd.f32 0.0, %v917
        %v919 = vpop.f32.mrb[0].mxu0
        %v920 = vadd.f32 0.0, %v919
        %v921 = vpop.f32.mrb[0].mxu0
        %v922 = vadd.f32 0.0, %v921
        %923 = vmatprep.mubr.bf16.mxu0 0
        %924 = vmatmul.mubr.bf16.gmra.mrb[0].mxu0 %v533
        %v925 = vpop.f32.mrb[0].mxu0
        %v926 = vadd.f32 0.0, %v925
        %v927 = vpop.f32.mrb[0].mxu0
        %v928 = vadd.f32 0.0, %v927
        %v929 = vpop.f32.mrb[0].mxu0
        %v930 = vadd.f32 0.0, %v929
        %v931 = vpop.f32.mrb[0].mxu0
        %v932 = vadd.f32 0.0, %v931
        %933 = vmatprep.mubr.bf16.mxu0 0
        %934 = vmatmul.mubr.bf16.gmra.mrb[0].mxu0 %v534
        %v935 = vpop.f32.mrb[0].mxu0
        %v936 = vadd.f32 0.0, %v935
        %v937 = vpop.f32.mrb[0].mxu0
        %v938 = vadd.f32 0.0, %v937
        %v939 = vpop.f32.mrb[0].mxu0
        %v940 = vadd.f32 0.0, %v939
        %v941 = vpop.f32.mrb[0].mxu0
        %v942 = vadd.f32 0.0, %v941
        %943 = vmatprep.mubr.bf16.mxu0 0
        %944 = vmatmul.mubr.bf16.gmra.mrb[0].mxu0 %v535
        %v945 = vpop.f32.mrb[0].mxu0
        %v946 = vadd.f32 0.0, %v945
        %v947 = vpop.f32.mrb[0].mxu0
        %v948 = vadd.f32 0.0, %v947
        %v949 = vpop.f32.mrb[0].mxu0
        %v950 = vadd.f32 0.0, %v949
        %v951 = vpop.f32.mrb[0].mxu0
        %v952 = vadd.f32 0.0, %v951
        %953 = vdwg.mxu0
        %v954 = vxor.u32 %v876, 2147483648
        %v955 = vxor.u32 %v878, 2147483648
        %v956 = vxor.u32 %v880, 2147483648
        %v957 = vxor.u32 %v882, 2147483648
        %v958 = vxor.u32 %v886, 2147483648
        %v959 = vxor.u32 %v888, 2147483648
        %v960 = vxor.u32 %v890, 2147483648
        %v961 = vxor.u32 %v892, 2147483648
        %v962 = vxor.u32 %v896, 2147483648
        %v963 = vxor.u32 %v898, 2147483648
        %v964 = vxor.u32 %v900, 2147483648
        %v965 = vxor.u32 %v902, 2147483648
        %v966 = vxor.u32 %v906, 2147483648
        %v967 = vxor.u32 %v908, 2147483648
        %v968 = vxor.u32 %v910, 2147483648
        %v969 = vxor.u32 %v912, 2147483648
        %v970 = vxor.u32 %v916, 2147483648
        %v971 = vxor.u32 %v918, 2147483648
        %v972 = vxor.u32 %v920, 2147483648
        %v973 = vxor.u32 %v922, 2147483648
        %v974 = vxor.u32 %v926, 2147483648
        %v975 = vxor.u32 %v928, 2147483648
        %v976 = vxor.u32 %v930, 2147483648
        %v977 = vxor.u32 %v932, 2147483648
        %v978 = vxor.u32 %v936, 2147483648
        %v979 = vxor.u32 %v938, 2147483648
        %v980 = vxor.u32 %v940, 2147483648
        %v981 = vxor.u32 %v942, 2147483648
        %v982 = vxor.u32 %v946, 2147483648
        %v983 = vxor.u32 %v948, 2147483648
        %v984 = vxor.u32 %v950, 2147483648
        %v985 = vxor.u32 %v952, 2147483648
        %v986 = vmul.f32 %v954, 1.442695
        %v987 = vpow.pop %v986
        %v988 = vmul.f32 %v955, 1.442695
        %v989 = vpow.pop %v988
        %v990 = vmul.f32 %v956, 1.442695
        %v991 = vpow.pop %v990
        %v992 = vmul.f32 %v957, 1.442695
        %v993 = vpow.pop %v992
        %v994 = vmul.f32 %v958, 1.442695
        %v995 = vpow.pop %v994
        %v996 = vmul.f32 %v959, 1.442695
        %v997 = vpow.pop %v996
        %v998 = vmul.f32 %v960, 1.442695
        %v999 = vpow.pop %v998
        %v1000 = vmul.f32 %v961, 1.442695
        %v1001 = vpow.pop %v1000
        %v1002 = vmul.f32 %v962, 1.442695
        %v1003 = vpow.pop %v1002
        %v1004 = vmul.f32 %v963, 1.442695
        %v1005 = vpow.pop %v1004
        %v1006 = vmul.f32 %v964, 1.442695
        %v1007 = vpow.pop %v1006
        %v1008 = vmul.f32 %v965, 1.442695
        %v1009 = vpow.pop %v1008
        %v1010 = vmul.f32 %v966, 1.442695
        %v1011 = vpow.pop %v1010
        %v1012 = vmul.f32 %v967, 1.442695
        %v1013 = vpow.pop %v1012
        %v1014 = vmul.f32 %v968, 1.442695
        %v1015 = vpow.pop %v1014
        %v1016 = vmul.f32 %v969, 1.442695
        %v1017 = vpow.pop %v1016
        %v1018 = vmul.f32 %v970, 1.442695
        %v1019 = vpow.pop %v1018
        %v1020 = vmul.f32 %v971, 1.442695
        %v1021 = vpow.pop %v1020
        %v1022 = vmul.f32 %v972, 1.442695
        %v1023 = vpow.pop %v1022
        %v1024 = vmul.f32 %v973, 1.442695
        %v1025 = vpow.pop %v1024
        %v1026 = vmul.f32 %v974, 1.442695
        %v1027 = vpow.pop %v1026
        %v1028 = vmul.f32 %v975, 1.442695
        %v1029 = vpow.pop %v1028
        %v1030 = vmul.f32 %v976, 1.442695
        %v1031 = vpow.pop %v1030
        %v1032 = vmul.f32 %v977, 1.442695
        %v1033 = vpow.pop %v1032
        %v1034 = vmul.f32 %v978, 1.442695
        %v1035 = vpow.pop %v1034
        %v1036 = vmul.f32 %v979, 1.442695
        %v1037 = vpow.pop %v1036
        %v1038 = vmul.f32 %v980, 1.442695
        %v1039 = vpow.pop %v1038
        %v1040 = vmul.f32 %v981, 1.442695
        %v1041 = vpow.pop %v1040
        %v1042 = vmul.f32 %v982, 1.442695
        %v1043 = vpow.pop %v1042
        %v1044 = vmul.f32 %v983, 1.442695
        %v1045 = vpow.pop %v1044
        %v1046 = vmul.f32 %v984, 1.442695
        %v1047 = vpow.pop %v1046
        %v1048 = vmul.f32 %v985, 1.442695
        %v1049 = vpow.pop %v1048
        %v1050 = vadd.f32 %v987, 1.0
        %v1051 = vadd.f32 %v989, 1.0
        %v1052 = vadd.f32 %v991, 1.0
        %v1053 = vadd.f32 %v993, 1.0
        %v1054 = vadd.f32 %v995, 1.0
        %v1055 = vadd.f32 %v997, 1.0
        %v1056 = vadd.f32 %v999, 1.0
        %v1057 = vadd.f32 %v1001, 1.0
        %v1058 = vadd.f32 %v1003, 1.0
        %v1059 = vadd.f32 %v1005, 1.0
        %v1060 = vadd.f32 %v1007, 1.0
        %v1061 = vadd.f32 %v1009, 1.0
        %v1062 = vadd.f32 %v1011, 1.0
        %v1063 = vadd.f32 %v1013, 1.0
        %v1064 = vadd.f32 %v1015, 1.0
        %v1065 = vadd.f32 %v1017, 1.0
        %v1066 = vadd.f32 %v1019, 1.0
        %v1067 = vadd.f32 %v1021, 1.0
        %v1068 = vadd.f32 %v1023, 1.0
        %v1069 = vadd.f32 %v1025, 1.0
        %v1070 = vadd.f32 %v1027, 1.0
        %v1071 = vadd.f32 %v1029, 1.0
        %v1072 = vadd.f32 %v1031, 1.0
        %v1073 = vadd.f32 %v1033, 1.0
        %v1074 = vadd.f32 %v1035, 1.0
        %v1075 = vadd.f32 %v1037, 1.0
        %v1076 = vadd.f32 %v1039, 1.0
        %v1077 = vadd.f32 %v1041, 1.0
        %v1078 = vadd.f32 %v1043, 1.0
        %v1079 = vadd.f32 %v1045, 1.0
        %v1080 = vadd.f32 %v1047, 1.0
        %v1081 = vadd.f32 %v1049, 1.0
        %v1082 = vrcp.pop %v1050
        %v1083 = vmul.f32 1.0, %v1082
        %v1084 = vrcp.pop %v1051
        %v1085 = vmul.f32 1.0, %v1084
        %v1086 = vrcp.pop %v1052
        %v1087 = vmul.f32 1.0, %v1086
        %v1088 = vrcp.pop %v1053
        %v1089 = vmul.f32 1.0, %v1088
        %v1090 = vrcp.pop %v1054
        %v1091 = vmul.f32 1.0, %v1090
        %v1092 = vrcp.pop %v1055
        %v1093 = vmul.f32 1.0, %v1092
        %v1094 = vrcp.pop %v1056
        %v1095 = vmul.f32 1.0, %v1094
        %v1096 = vrcp.pop %v1057
        %v1097 = vmul.f32 1.0, %v1096
        %v1098 = vrcp.pop %v1058
        %v1099 = vmul.f32 1.0, %v1098
        %v1100 = vrcp.pop %v1059
        %v1101 = vmul.f32 1.0, %v1100
        %v1102 = vrcp.pop %v1060
        %v1103 = vmul.f32 1.0, %v1102
        %v1104 = vrcp.pop %v1061
        %v1105 = vmul.f32 1.0, %v1104
        %v1106 = vrcp.pop %v1062
        %v1107 = vmul.f32 1.0, %v1106
        %v1108 = vrcp.pop %v1063
        %v1109 = vmul.f32 1.0, %v1108
        %v1110 = vrcp.pop %v1064
        %v1111 = vmul.f32 1.0, %v1110
        %v1112 = vrcp.pop %v1065
        %v1113 = vmul.f32 1.0, %v1112
        %v1114 = vrcp.pop %v1066
        %v1115 = vmul.f32 1.0, %v1114
        %v1116 = vrcp.pop %v1067
        %v1117 = vmul.f32 1.0, %v1116
        %v1118 = vrcp.pop %v1068
        %v1119 = vmul.f32 1.0, %v1118
        %v1120 = vrcp.pop %v1069
        %v1121 = vmul.f32 1.0, %v1120
        %v1122 = vrcp.pop %v1070
        %v1123 = vmul.f32 1.0, %v1122
        %v1124 = vrcp.pop %v1071
        %v1125 = vmul.f32 1.0, %v1124
        %v1126 = vrcp.pop %v1072
        %v1127 = vmul.f32 1.0, %v1126
        %v1128 = vrcp.pop %v1073
        %v1129 = vmul.f32 1.0, %v1128
        %v1130 = vrcp.pop %v1074
        %v1131 = vmul.f32 1.0, %v1130
        %v1132 = vrcp.pop %v1075
        %v1133 = vmul.f32 1.0, %v1132
        %v1134 = vrcp.pop %v1076
        %v1135 = vmul.f32 1.0, %v1134
        %v1136 = vrcp.pop %v1077
        %v1137 = vmul.f32 1.0, %v1136
        %v1138 = vrcp.pop %v1078
        %v1139 = vmul.f32 1.0, %v1138
        %v1140 = vrcp.pop %v1079
        %v1141 = vmul.f32 1.0, %v1140
        %v1142 = vrcp.pop %v1080
        %v1143 = vmul.f32 1.0, %v1142
        %v1144 = vrcp.pop %v1081
        %v1145 = vmul.f32 1.0, %v1144
        %v1146 = vmul.f32 %v876, %v1083
        %v1147 = vmul.f32 %v878, %v1085
        %v1148 = vmul.f32 %v880, %v1087
        %v1149 = vmul.f32 %v882, %v1089
        %v1150 = vmul.f32 %v886, %v1091
        %v1151 = vmul.f32 %v888, %v1093
        %v1152 = vmul.f32 %v890, %v1095
        %v1153 = vmul.f32 %v892, %v1097
        %v1154 = vmul.f32 %v896, %v1099
        %v1155 = vmul.f32 %v898, %v1101
        %v1156 = vmul.f32 %v900, %v1103
        %v1157 = vmul.f32 %v902, %v1105
        %v1158 = vmul.f32 %v906, %v1107
        %v1159 = vmul.f32 %v908, %v1109
        %v1160 = vmul.f32 %v910, %v1111
        %v1161 = vmul.f32 %v912, %v1113
        %v1162 = vmul.f32 %v916, %v1115
        %v1163 = vmul.f32 %v918, %v1117
        %v1164 = vmul.f32 %v920, %v1119
        %v1165 = vmul.f32 %v922, %v1121
        %v1166 = vmul.f32 %v926, %v1123
        %v1167 = vmul.f32 %v928, %v1125
        %v1168 = vmul.f32 %v930, %v1127
        %v1169 = vmul.f32 %v932, %v1129
        %v1170 = vmul.f32 %v936, %v1131
        %v1171 = vmul.f32 %v938, %v1133
        %v1172 = vmul.f32 %v940, %v1135
        %v1173 = vmul.f32 %v942, %v1137
        %v1174 = vmul.f32 %v946, %v1139
        %v1175 = vmul.f32 %v948, %v1141
        %v1176 = vmul.f32 %v950, %v1143
        %v1177 = vmul.f32 %v952, %v1145
        %v1178 = vmul.f32 %v763, %v1146
        %v1179 = vmul.f32 %v765, %v1147
        %v1180 = vmul.f32 %v767, %v1148
        %v1181 = vmul.f32 %v769, %v1149
        %v1182 = vmul.f32 %v773, %v1150
        %v1183 = vmul.f32 %v775, %v1151
        %v1184 = vmul.f32 %v777, %v1152
        %v1185 = vmul.f32 %v779, %v1153
        %v1186 = vmul.f32 %v783, %v1154
        %v1187 = vmul.f32 %v785, %v1155
        %v1188 = vmul.f32 %v787, %v1156
        %v1189 = vmul.f32 %v789, %v1157
        %v1190 = vmul.f32 %v793, %v1158
        %v1191 = vmul.f32 %v795, %v1159
        %v1192 = vmul.f32 %v797, %v1160
        %v1193 = vmul.f32 %v799, %v1161
        %v1194 = vmul.f32 %v803, %v1162
        %v1195 = vmul.f32 %v805, %v1163
        %v1196 = vmul.f32 %v807, %v1164
        %v1197 = vmul.f32 %v809, %v1165
        %v1198 = vmul.f32 %v813, %v1166
        %v1199 = vmul.f32 %v815, %v1167
        %v1200 = vmul.f32 %v817, %v1168
        %v1201 = vmul.f32 %v819, %v1169
        %v1202 = vmul.f32 %v823, %v1170
        %v1203 = vmul.f32 %v825, %v1171
        %v1204 = vmul.f32 %v827, %v1172
        %v1205 = vmul.f32 %v829, %v1173
        %v1206 = vmul.f32 %v833, %v1174
        %v1207 = vmul.f32 %v835, %v1175
        %v1208 = vmul.f32 %v837, %v1176
        %v1209 = vmul.f32 %v839, %v1177
        %v1210 = vpack.c.bf16 %v1180, %v1178
        %v1211 = vpack.c.bf16 %v1181, %v1179
        %v1212 = vpack.c.bf16 %v1184, %v1182
        %v1213 = vpack.c.bf16 %v1185, %v1183
        %v1214 = vpack.c.bf16 %v1188, %v1186
        %v1215 = vpack.c.bf16 %v1189, %v1187
        %v1216 = vpack.c.bf16 %v1192, %v1190
        %v1217 = vpack.c.bf16 %v1193, %v1191
        %v1218 = vpack.c.bf16 %v1196, %v1194
        %v1219 = vpack.c.bf16 %v1197, %v1195
        %v1220 = vpack.c.bf16 %v1200, %v1198
        %v1221 = vpack.c.bf16 %v1201, %v1199
        %v1222 = vpack.c.bf16 %v1204, %v1202
        %v1223 = vpack.c.bf16 %v1205, %v1203
        %v1224 = vpack.c.bf16 %v1208, %v1206
        %v1225 = vpack.c.bf16 %v1209, %v1207
        %v1226 = vld [vmem:[#allocation7] sm:$0xf]
        %v1227 = vld [vmem:[#allocation7 + $0x4] sm:$0xf]
        %v1228 = vld [vmem:[#allocation7 + $0x8] sm:$0xf]
        %v1229 = vld [vmem:[#allocation7 + $0xc] sm:$0xf]
        %v1230 = vld [vmem:[#allocation7 + $0x10] sm:$0xf]
        %v1231 = vld [vmem:[#allocation7 + $0x14] sm:$0xf]
        %v1232 = vld [vmem:[#allocation7 + $0x18] sm:$0xf]
        %v1233 = vld [vmem:[#allocation7 + $0x1c] sm:$0xf]
        %v1234 = vld [vmem:[#allocation7 + $0x20] sm:$0xf]
        %v1235 = vld [vmem:[#allocation7 + $0x24] sm:$0xf]
        %v1236 = vld [vmem:[#allocation7 + $0x28] sm:$0xf]
        %v1237 = vld [vmem:[#allocation7 + $0x2c] sm:$0xf]
        %v1238 = vld [vmem:[#allocation7 + $0x30] sm:$0xf]
        %v1239 = vld [vmem:[#allocation7 + $0x34] sm:$0xf]
        %v1240 = vld [vmem:[#allocation7 + $0x38] sm:$0xf]
        %v1241 = vld [vmem:[#allocation7 + $0x3c] sm:$0xf]
        %v1242 = vld [vmem:[#allocation7 + $0x40] sm:$0xf]
        %v1243 = vld [vmem:[#allocation7 + $0x44] sm:$0xf]
        %v1244 = vld [vmem:[#allocation7 + $0x48] sm:$0xf]
        %v1245 = vld [vmem:[#allocation7 + $0x4c] sm:$0xf]
        %v1246 = vld [vmem:[#allocation7 + $0x50] sm:$0xf]
        %v1247 = vld [vmem:[#allocation7 + $0x54] sm:$0xf]
        %v1248 = vld [vmem:[#allocation7 + $0x58] sm:$0xf]
        %v1249 = vld [vmem:[#allocation7 + $0x5c] sm:$0xf]
        %v1250 = vld [vmem:[#allocation7 + $0x60] sm:$0xf]
        %v1251 = vld [vmem:[#allocation7 + $0x64] sm:$0xf]
        %v1252 = vld [vmem:[#allocation7 + $0x68] sm:$0xf]
        %v1253 = vld [vmem:[#allocation7 + $0x6c] sm:$0xf]
        %v1254 = vld [vmem:[#allocation7 + $0x70] sm:$0xf]
        %v1255 = vld [vmem:[#allocation7 + $0x74] sm:$0xf]
        %v1256 = vld [vmem:[#allocation7 + $0x78] sm:$0xf]
        %v1257 = vld [vmem:[#allocation7 + $0x7c] sm:$0xf]
        %v1290 = vunpack.c.l.b16 %v1226
        %v1291 = vunpack.c.l.b16 %v1227
        %v1292 = vunpack.c.l.b16 %v1228
        %v1293 = vunpack.c.l.b16 %v1229
        %v1294 = vunpack.c.l.b16 %v1230
        %v1295 = vunpack.c.l.b16 %v1231
        %v1296 = vunpack.c.l.b16 %v1232
        %v1297 = vunpack.c.l.b16 %v1233
        %v1298 = vunpack.c.l.b16 %v1234
        %v1299 = vunpack.c.l.b16 %v1235
        %v1300 = vunpack.c.l.b16 %v1236
        %v1301 = vunpack.c.l.b16 %v1237
        %v1302 = vunpack.c.l.b16 %v1238
        %v1303 = vunpack.c.l.b16 %v1239
        %v1304 = vunpack.c.l.b16 %v1240
        %v1305 = vunpack.c.l.b16 %v1241
        %v1306 = vunpack.c.l.b16 %v1242
        %v1307 = vunpack.c.l.b16 %v1243
        %v1308 = vunpack.c.l.b16 %v1244
        %v1309 = vunpack.c.l.b16 %v1245
        %v1310 = vunpack.c.l.b16 %v1246
        %v1311 = vunpack.c.l.b16 %v1247
        %v1312 = vunpack.c.l.b16 %v1248
        %v1313 = vunpack.c.l.b16 %v1249
        %v1314 = vunpack.c.l.b16 %v1250
        %v1315 = vunpack.c.l.b16 %v1251
        %v1316 = vunpack.c.l.b16 %v1252
        %v1317 = vunpack.c.l.b16 %v1253
        %v1318 = vunpack.c.l.b16 %v1254
        %v1319 = vunpack.c.l.b16 %v1255
        %v1320 = vunpack.c.l.b16 %v1256
        %v1321 = vunpack.c.l.b16 %v1257
        %v1322 = vpack.c.b16 %v1291, %v1290
        %v1323 = vpack.c.b16 %v1293, %v1292
        %v1324 = vpack.c.b16 %v1295, %v1294
        %v1325 = vpack.c.b16 %v1297, %v1296
        %v1326 = vpack.c.b16 %v1299, %v1298
        %v1327 = vpack.c.b16 %v1301, %v1300
        %v1328 = vpack.c.b16 %v1303, %v1302
        %v1329 = vpack.c.b16 %v1305, %v1304
        %v1330 = vpack.c.b16 %v1307, %v1306
        %v1331 = vpack.c.b16 %v1309, %v1308
        %v1332 = vpack.c.b16 %v1311, %v1310
        %v1333 = vpack.c.b16 %v1313, %v1312
        %v1334 = vpack.c.b16 %v1315, %v1314
        %v1335 = vpack.c.b16 %v1317, %v1316
        %v1336 = vpack.c.b16 %v1319, %v1318
        %v1337 = vpack.c.b16 %v1321, %v1320
        %1354 = vmatprep.subr.bf16.mxu0 0
        %1355 = vmatpush1.bf16.msra.mxu0 %v1322
        %1356 = vmatprep.subr.bf16.mxu0 0
        %1357 = vmatpush1.bf16.msra.mxu0 %v1323
        %1358 = vmatprep.subr.bf16.mxu0 0
        %1359 = vmatpush1.bf16.msra.mxu0 %v1324
        %1360 = vmatprep.subr.bf16.mxu0 0
        %1361 = vmatpush1.bf16.msra.mxu0 %v1325
        %1362 = vmatprep.subr.bf16.mxu0 0
        %1363 = vmatpush1.bf16.msra.mxu0 %v1326
        %1364 = vmatprep.subr.bf16.mxu0 0
        %1365 = vmatpush1.bf16.msra.mxu0 %v1327
        %1366 = vmatprep.subr.bf16.mxu0 0
        %1367 = vmatpush1.bf16.msra.mxu0 %v1328
        %1368 = vmatprep.subr.bf16.mxu0 0
        %1369 = vmatpush1.bf16.msra.mxu0 %v1329
        %1370 = vmatprep.subr.bf16.mxu0 0
        %1371 = vmatpush1.bf16.msra.mxu0 %v1330
        %1372 = vmatprep.subr.bf16.mxu0 0
        %1373 = vmatpush1.bf16.msra.mxu0 %v1331
        %1374 = vmatprep.subr.bf16.mxu0 0
        %1375 = vmatpush1.bf16.msra.mxu0 %v1332
        %1376 = vmatprep.subr.bf16.mxu0 0
        %1377 = vmatpush1.bf16.msra.mxu0 %v1333
        %1378 = vmatprep.subr.bf16.mxu0 0
        %1379 = vmatpush1.bf16.msra.mxu0 %v1334
        %1380 = vmatprep.subr.bf16.mxu0 0
        %1381 = vmatpush1.bf16.msra.mxu0 %v1335
        %1382 = vmatprep.subr.bf16.mxu0 0
        %1383 = vmatpush1.bf16.msra.mxu0 %v1336
        %1384 = vmatprep.subr.bf16.mxu0 0
        %1385 = vmatpush1.bf16.msra.mxu0 %v1337
        %1386 = vmatprep.mubr.bf16.mxu0 %v1211
        %1387 = vmatmul.mubr.bf16.gmra.mrb[0].mxu0 %v1210
        %v1388 = vpop.f32.mrb[0].mxu0
        %v1389 = vadd.f32 0.0, %v1388
        %v1390 = vpop.f32.mrb[0].mxu0
        %v1391 = vpop.f32.mrb[0].mxu0
        %v1392 = vadd.f32 0.0, %v1391
        %v1393 = vpop.f32.mrb[0].mxu0
        %1394 = vmatprep.mubr.bf16.mxu0 %v1213
        %1395 = vmatmul.mubr.bf16.gmra.mrb[0].mxu0 %v1212
        %v1396 = vpop.f32.mrb[0].mxu0
        %v1397 = vadd.f32 0.0, %v1396
        %v1398 = vpop.f32.mrb[0].mxu0
        %v1399 = vpop.f32.mrb[0].mxu0
        %v1400 = vadd.f32 0.0, %v1399
        %v1401 = vpop.f32.mrb[0].mxu0
        %1402 = vmatprep.mubr.bf16.mxu0 %v1215
        %1403 = vmatmul.mubr.bf16.gmra.mrb[0].mxu0 %v1214
        %v1404 = vpop.f32.mrb[0].mxu0
        %v1405 = vadd.f32 0.0, %v1404
        %v1406 = vpop.f32.mrb[0].mxu0
        %v1407 = vpop.f32.mrb[0].mxu0
        %v1408 = vadd.f32 0.0, %v1407
        %v1409 = vpop.f32.mrb[0].mxu0
        %1410 = vmatprep.mubr.bf16.mxu0 %v1217
        %1411 = vmatmul.mubr.bf16.gmra.mrb[0].mxu0 %v1216
        %v1412 = vpop.f32.mrb[0].mxu0
        %v1413 = vadd.f32 0.0, %v1412
        %v1414 = vpop.f32.mrb[0].mxu0
        %v1415 = vpop.f32.mrb[0].mxu0
        %v1416 = vadd.f32 0.0, %v1415
        %v1417 = vpop.f32.mrb[0].mxu0
        %1418 = vmatprep.mubr.bf16.mxu0 %v1219
        %1419 = vmatmul.mubr.bf16.gmra.mrb[0].mxu0 %v1218
        %v1420 = vpop.f32.mrb[0].mxu0
        %v1421 = vadd.f32 0.0, %v1420
        %v1422 = vpop.f32.mrb[0].mxu0
        %v1423 = vpop.f32.mrb[0].mxu0
        %v1424 = vadd.f32 0.0, %v1423
        %v1425 = vpop.f32.mrb[0].mxu0
        %1426 = vmatprep.mubr.bf16.mxu0 %v1221
        %1427 = vmatmul.mubr.bf16.gmra.mrb[0].mxu0 %v1220
        %v1428 = vpop.f32.mrb[0].mxu0
        %v1429 = vadd.f32 0.0, %v1428
        %v1430 = vpop.f32.mrb[0].mxu0
        %v1431 = vpop.f32.mrb[0].mxu0
        %v1432 = vadd.f32 0.0, %v1431
        %v1433 = vpop.f32.mrb[0].mxu0
        %1434 = vmatprep.mubr.bf16.mxu0 %v1223
        %1435 = vmatmul.mubr.bf16.gmra.mrb[0].mxu0 %v1222
        %v1436 = vpop.f32.mrb[0].mxu0
        %v1437 = vadd.f32 0.0, %v1436
        %v1438 = vpop.f32.mrb[0].mxu0
        %v1439 = vpop.f32.mrb[0].mxu0
        %v1440 = vadd.f32 0.0, %v1439
        %v1441 = vpop.f32.mrb[0].mxu0
        %1442 = vmatprep.mubr.bf16.mxu0 %v1225
        %1443 = vmatmul.mubr.bf16.gmra.mrb[0].mxu0 %v1224
        %v1444 = vpop.f32.mrb[0].mxu0
        %v1445 = vadd.f32 0.0, %v1444
        %v1446 = vpop.f32.mrb[0].mxu0
        %v1447 = vpop.f32.mrb[0].mxu0
        %v1448 = vadd.f32 0.0, %v1447
        %v1449 = vpop.f32.mrb[0].mxu0
        %1450 = vdwg.mxu0
        %1451 = vst [vmem:[%s277] sm:$0xff] %v1389
        %1452 = vst [vmem:[%s277 + $0x8] sm:$0xff] %v1392
        %1453 = vst [vmem:[%s277 + $0x10] sm:$0xff] %v1397
        %1454 = vst [vmem:[%s277 + $0x18] sm:$0xff] %v1400
        %1455 = vst [vmem:[%s277 + $0x20] sm:$0xff] %v1405
        %1456 = vst [vmem:[%s277 + $0x28] sm:$0xff] %v1408
        %1457 = vst [vmem:[%s277 + $0x30] sm:$0xff] %v1413
        %1458 = vst [vmem:[%s277 + $0x38] sm:$0xff] %v1416
        %1459 = vst [vmem:[%s277 + $0x40] sm:$0xff] %v1421
        %1460 = vst [vmem:[%s277 + $0x48] sm:$0xff] %v1424
        %1461 = vst [vmem:[%s277 + $0x50] sm:$0xff] %v1429
        %1462 = vst [vmem:[%s277 + $0x58] sm:$0xff] %v1432
        %1463 = vst [vmem:[%s277 + $0x60] sm:$0xff] %v1437
        %1464 = vst [vmem:[%s277 + $0x68] sm:$0xff] %v1440
        %1465 = vst [vmem:[%s277 + $0x70] sm:$0xff] %v1445
        %1466 = vst [vmem:[%s277 + $0x78] sm:$0xff] %v1448
        %s1467 = sand.u32 %s141, 1
        %s1468 = scalar_lea.sflag [#allocation4], %s1467
        %s1469 = sand.u32 %s141, 1
        %s1470 = smul.addr %s1469, 128
        %s1471 = scalar_lea.vmem [#allocation8], %s1470
        // Predicated region
        $region53: #{tpu_custom_call.1} parent=39 // pred_check
          %p1472 = pneg %p151
        $region54: #{tpu_custom_call.1} parent=39 // pred_check_branch
          %1474 = sbr.rel (%p1472) target = $region56
        $region55: #{tpu_custom_call.1} parent=39 // pred_region
          %s1475 = smul.u32 16, %s23
          %s1476 = ssub.s32 20, %s1475
          %p1477 = scmp.lt.s32.totalorder %s1476, 16
          %s1478 = scalar_select %p1477, %s1476, 16
          %s1479 = smul.u32 128, %s1478
          %s1481 = ssub.s32 2048, %s1479
          %1482 = vsyncadd %s1468, %s1481
          %p1483 = scmp.ne.s32.totalorder 0, %s1479
          %s1484 = smul.addr %s1475, 128
          %s1485 = scalar_lea.hbm %s5, %s1484
          %s1486 = smul.u32 8, %s1478
          %s1487 = sshll.u32 %s1471, 4
          %s1488 = int_to_ptr.vmem [resolvable:$true] %s1487
          %s1489 = sshll.u32 %s1486, 4
          %1493 = dma.vmem_to_hbm [thread:$0]  (%p1483), %s1488, %s1489, %s1485, %s1468, 128, 128, 8
        $region56: #{tpu_custom_call.1} parent=39 // pred_fallthru
          _
      $region40: #{tpu_custom_call.1} parent=5 // pred_fallthru
        _
      %p1494 = scmp.le.s32.totalorder 2, %s18
      // Predicated region
      $region57: #{tpu_custom_call.1} parent=5 // pred_check
        %p1495 = pneg %p1494
      $region58: #{tpu_custom_call.1} parent=5 // pred_check_branch
        %1497 = sbr.rel (%p1495) target = $region60
      $region59: #{tpu_custom_call.1} parent=5 // pred_region
        %s1498 = ssub.s32 %s18, 2
        // Predicated region
        $region61: #{tpu_custom_call.1} parent=59 // pred_check
          %p1499 = pneg %p157
        $region62: #{tpu_custom_call.1} parent=59 // pred_check_branch
          %1501 = sbr.rel (%p1499) target = $region64
        $region63: #{tpu_custom_call.1} parent=59 // pred_region
          %s1502 = sand.u32 %s142, 1
          %s1503 = scalar_lea.sflag [#allocation4], %s1502
          %s1504 = sand.u32 %s142, 1
          %s1505 = smul.addr %s1504, 128
          %s1506 = scalar_lea.vmem [#allocation8], %s1505
          %1507 = dma.done %s1503, 2048
        $region64: #{tpu_custom_call.1} parent=59 // pred_fallthru
          _
      $region60: #{tpu_custom_call.1} parent=5 // pred_fallthru
        _
    $region6: #{tpu_custom_call.1} parent=1 // loop_footer
      %s22 = sadd.s32 1, %s18
    $region7: #{tpu_custom_call.1} parent=1 // loop_footer_branch
      %17 = sbr.rel target = $region3
    $region8: #{tpu_custom_call.1} parent=1 // loop_exit
      _
    %1508 = vsyncpa [#allocation3], 1
    %s1509 = scalar_lea.sflag [#allocation3], 1
    %1510 = vsyncpa %s1509, 1
    %1511 = vsyncpa [#allocation6], 1
    %1512 = vsyncpa [#allocation4], 1
    %s1513 = scalar_lea.sflag [#allocation4], 1
    %1514 = vsyncpa %s1513, 1

// kernel: tpu_custom_call.1
$region0: #{tpu_custom_call.1}
  #allocation0 [shape = 'u32[]', space=smem, size = 0x4, offset = 0x4, fixed_abs, tag = 'smem constant byte address 0x4 - core index']
  #allocation1 [shape = 'u32[144,128]{1,0:T(1,128)}', space=vmem, size = 0x12000, scoped, tag = 'internal scratch']
  %s0 = inlined_call_operand.hbm [shape: f32[160,128], index: 0, kind: input, shape index: {}]
  %s1 = inlined_call_operand.vmem [shape: f32[1,128], index: 1, kind: input, shape index: {}]
  %s2 = inlined_call_operand.vmem [shape: f32[1,128], index: 2, kind: input, shape index: {}]
  %s3 = inlined_call_operand.hbm [shape: bf16[128,512], index: 3, kind: input, shape index: {}]
  %s4 = inlined_call_operand.hbm [shape: bf16[256,128], index: 4, kind: input, shape index: {}]
  %s5 = inlined_call_operand.hbm [shape: f32[160,128], index: 5, kind: output, shape index: {}]
  %s6 = sld [smem:[#allocation0]]
  $region65: #{tpu_custom_call.1} parent=0
    _
  %s8 = ssub.s32 1, %s6
  %s9 = scalar_select 0, %s8, %s6
  $region1: #{tpu_custom_call.1} parent=0
    #allocation2 [shape = 'u8[131072]{0}', space=vmem, size = 0x20000, scoped, tag = 'input window, operand 0']
    #allocation3 [shape = 's32[2]{0}', space=sflag, size = 0x8, scoped, tag = 'scoped memory for tpu_custom_call.1']
    #allocation4 [shape = 's32[2]{0}', space=sflag, size = 0x8, scoped, tag = 'scoped memory for tpu_custom_call.1']
    #allocation5 [shape = 'u8[131072]{0}', space=vmem, size = 0x20000, scoped, tag = 'input window, operand 3, single buffered']
    #allocation6 [shape = 's32[1]{0}', space=sflag, size = 0x4, scoped, tag = 'scoped memory for tpu_custom_call.1']
    #allocation7 [shape = 'u8[65536]{0}', space=vmem, size = 0x10000, scoped, tag = 'input window, operand 4, single buffered']
    #allocation8 [shape = 'u8[131072]{0}', space=vmem, size = 0x20000, scoped, tag = 'output window, operand 0']
    %10 = vsyncpa [#allocation3], 0
    %s11 = scalar_lea.sflag [#allocation3], 1
    %12 = vsyncpa %s11, 0
    %13 = vsyncpa [#allocation6], 0
    %14 = vsyncpa [#allocation4], 0
    %s15 = scalar_lea.sflag [#allocation4], 1
    %16 = vsyncpa %s15, 0
    loop: start=0, step=1, limit=4
    $region2: #{tpu_custom_call.1} parent=1 // loop_pre_header
      _
    $region3: #{tpu_custom_call.1} parent=1 // loop_header
      %s18 = sphi 0, %s22
      %p19 = scmp.ge.s32.totalorder %s18, 4
      %s28 = sphi 0, %s30
      %s31 = sphi 0, %s28
      %s32 = sphi 0, %s31
      %s48 = sphi 0, %s32
      %s52 = sphi 0, %s52
      %s54 = sphi 0, %s52
      %s55 = sphi 0, %s54
      %s69 = sphi 0, %s55
      %s73 = sphi 0, %s73
      %s75 = sphi 0, %s73
      %s76 = sphi 0, %s75
      %s90 = sphi 0, %s76
      %s94 = sphi 0, %s94
      %s96 = sphi 0, %s94
      %s97 = sphi 0, %s96
      %s111 = sphi 0, %s97
      %s115 = sphi 0, %s115
      %s117 = sphi 0, %s115
      %s118 = sphi 0, %s117
      %s132 = sphi 0, %s118
      %s138 = sphi 0, %s140
      %s141 = sphi 0, %s138
      %s142 = sphi 0, %s141
      %s158 = sphi 0, %s142
    $region4: #{tpu_custom_call.1} parent=1 // loop_header_branch
      %21 = sbr.rel (%p19) target = $region8
    $region5: #{tpu_custom_call.1} parent=1 // loop_body
      %s23 = ssub.s32 %s18, 1
      %s24 = ssub.s32 %s18, 2
      %s25 = sadd.s32 %s18, 1
      %s26 = ssub.s32 %s18, %s25
      %p27 = scmp.eq.s32.totalorder %s26, 0
      %s29 = sadd.s32 %s28, 1
      %s30 = scalar_select %p27, %s28, %s29
      %p33 = pneg %p27
      %p34 = scmp.eq.s32.totalorder %s18, 1
      %p35 = por %p33, %p34
      %p36 = scmp.ne.s32.totalorder %s28, %s31
      %p37 = scmp.eq.s32.totalorder %s18, 0
      %p38 = por %p36, %p37
      %p39 = scmp.ne.s32.totalorder %s28, %s31
      %p40 = scmp.eq.s32.totalorder %s23, 1
      %p41 = por %p39, %p40
      %p42 = scmp.ne.s32.totalorder %s31, %s32
      %p43 = scmp.eq.s32.totalorder %s23, 0
      %p44 = por %p42, %p43
      %p45 = scmp.ne.s32.totalorder %s31, %s32
      %p46 = scmp.eq.s32.totalorder %s24, 1
      %p47 = por %p45, %p46
      %p49 = scmp.ne.s32.totalorder %s32, %s48
      %p50 = scmp.eq.s32.totalorder %s24, 0
      %p51 = por %p49, %p50
      %s53 = sadd.s32 %s52, 1
      %p56 = scmp.eq.s32.totalorder %s18, 1
      %p57 = scmp.ne.s32.totalorder %s52, %s54
      %p58 = scmp.eq.s32.totalorder %s18, 0
      %p59 = por %p57, %p58
      %p60 = scmp.ne.s32.totalorder %s52, %s54
      %p61 = scmp.eq.s32.totalorder %s23, 1
      %p62 = por %p60, %p61
      %p63 = scmp.ne.s32.totalorder %s54, %s55
      %p64 = scmp.eq.s32.totalorder %s23, 0
      %p65 = por %p63, %p64
      %p66 = scmp.ne.s32.totalorder %s54, %s55
      %p67 = scmp.eq.s32.totalorder %s24, 1
      %p68 = por %p66, %p67
      %p70 = scmp.ne.s32.totalorder %s55, %s69
      %p71 = scmp.eq.s32.totalorder %s24, 0
      %p72 = por %p70, %p71
      %s74 = sadd.s32 %s73, 1
      %p77 = scmp.eq.s32.totalorder %s18, 1
      %p78 = scmp.ne.s32.totalorder %s73, %s75
      %p79 = scmp.eq.s32.totalorder %s18, 0
      %p80 = por %p78, %p79
      %p81 = scmp.ne.s32.totalorder %s73, %s75
      %p82 = scmp.eq.s32.totalorder %s23, 1
      %p83 = por %p81, %p82
      %p84 = scmp.ne.s32.totalorder %s75, %s76
      %p85 = scmp.eq.s32.totalorder %s23, 0
      %p86 = por %p84, %p85
      %p87 = scmp.ne.s32.totalorder %s75, %s76
      %p88 = scmp.eq.s32.totalorder %s24, 1
      %p89 = por %p87, %p88
      %p91 = scmp.ne.s32.totalorder %s76, %s90
      %p92 = scmp.eq.s32.totalorder %s24, 0
      %p93 = por %p91, %p92
      %s95 = sadd.s32 %s94, 1
      %p98 = scmp.eq.s32.totalorder %s18, 1
      %p99 = scmp.ne.s32.totalorder %s94, %s96
      %p100 = scmp.eq.s32.totalorder %s18, 0
      %p101 = por %p99, %p100
      %p102 = scmp.ne.s32.totalorder %s94, %s96
      %p103 = scmp.eq.s32.totalorder %s23, 1
      %p104 = por %p102, %p103
      %p105 = scmp.ne.s32.totalorder %s96, %s97
      %p106 = scmp.eq.s32.totalorder %s23, 0
      %p107 = por %p105, %p106
      %p108 = scmp.ne.s32.totalorder %s96, %s97
      %p109 = scmp.eq.s32.totalorder %s24, 1
      %p110 = por %p108, %p109
      %p112 = scmp.ne.s32.totalorder %s97, %s111
      %p113 = scmp.eq.s32.totalorder %s24, 0
      %p114 = por %p112, %p113
      %s116 = sadd.s32 %s115, 1
      %p119 = scmp.eq.s32.totalorder %s18, 1
      %p120 = scmp.ne.s32.totalorder %s115, %s117
      %p121 = scmp.eq.s32.totalorder %s18, 0
      %p122 = por %p120, %p121
      %p123 = scmp.ne.s32.totalorder %s115, %s117
      %p124 = scmp.eq.s32.totalorder %s23, 1
      %p125 = por %p123, %p124
      %p126 = scmp.ne.s32.totalorder %s117, %s118
      %p127 = scmp.eq.s32.totalorder %s23, 0
      %p128 = por %p126, %p127
      %p129 = scmp.ne.s32.totalorder %s117, %s118
      %p130 = scmp.eq.s32.totalorder %s24, 1
      %p131 = por %p129, %p130
      %p133 = scmp.ne.s32.totalorder %s118, %s132
      %p134 = scmp.eq.s32.totalorder %s24, 0
      %p135 = por %p133, %p134
      %s136 = ssub.s32 %s18, %s25
      %p137 = scmp.eq.s32.totalorder %s136, 0
      %s139 = sadd.s32 %s138, 1
      %s140 = scalar_select %p137, %s138, %s139
      %p143 = pneg %p137
      %p144 = scmp.eq.s32.totalorder %s18, 1
      %p145 = por %p143, %p144
      %p146 = scmp.ne.s32.totalorder %s138, %s141
      %p147 = scmp.eq.s32.totalorder %s18, 0
      %p148 = por %p146, %p147
      %p149 = scmp.ne.s32.totalorder %s138, %s141
      %p150 = scmp.eq.s32.totalorder %s23, 1
      %p151 = por %p149, %p150
      %p152 = scmp.ne.s32.totalorder %s141, %s142
      %p153 = scmp.eq.s32.totalorder %s23, 0
      %p154 = por %p152, %p153
      %p155 = scmp.ne.s32.totalorder %s141, %s142
      %p156 = scmp.eq.s32.totalorder %s24, 1
      %p157 = por %p155, %p156
      %p159 = scmp.ne.s32.totalorder %s142, %s158
      %p160 = scmp.eq.s32.totalorder %s24, 0
      %p161 = por %p159, %p160
      %p162 = scmp.le.s32.totalorder 1, %s18
      %p163 = scmp.lt.s32.totalorder %s18, 3
      %p164 = pnand %p162, %p163
      %p165 = pneg %p164
      // Predicated region
      $region9: #{tpu_custom_call.1} parent=5 // pred_check
        _
      $region10: #{tpu_custom_call.1} parent=5 // pred_check_branch
        %167 = sbr.rel (%p164) target = $region12
      $region11: #{tpu_custom_call.1} parent=5 // pred_region
        %s168 = ssub.s32 %s18, 1
        // Predicated region
        $region13: #{tpu_custom_call.1} parent=11 // pred_check
          %p169 = pneg %p65
        $region14: #{tpu_custom_call.1} parent=11 // pred_check_branch
          %171 = sbr.rel (%p169) target = $region16
        $region15: #{tpu_custom_call.1} parent=11 // pred_region
          _
        $region16: #{tpu_custom_call.1} parent=11 // pred_fallthru
          _
        // Predicated region
        $region17: #{tpu_custom_call.1} parent=11 // pred_check
          %p172 = pneg %p86
        $region18: #{tpu_custom_call.1} parent=11 // pred_check_branch
          %174 = sbr.rel (%p172) target = $region20
        $region19: #{tpu_custom_call.1} parent=11 // pred_region
          _
        $region20: #{tpu_custom_call.1} parent=11 // pred_fallthru
          _
        // Predicated region
        $region21: #{tpu_custom_call.1} parent=11 // pred_check
          %p175 = pneg %p107
        $region22: #{tpu_custom_call.1} parent=11 // pred_check_branch
          %177 = sbr.rel (%p175) target = $region24
        $region23: #{tpu_custom_call.1} parent=11 // pred_region
          %s179 = ssub.s32 4096, 4096
          %180 = vsyncadd [#allocation6], %s179
          %s181 = sshll.u32 [#allocation5], 4
          %s182 = int_to_ptr.vmem [resolvable:$true] %s181
          %187 = dma.hbm_to_vmem [thread:$0]  %s3, 4096, %s182, [#allocation6], 256, 256, 16
        $region24: #{tpu_custom_call.1} parent=11 // pred_fallthru
          _
        // Predicated region
        $region25: #{tpu_custom_call.1} parent=11 // pred_check
          %p188 = pneg %p128
        $region26: #{tpu_custom_call.1} parent=11 // pred_check_branch
          %190 = sbr.rel (%p188) target = $region28
        $region27: #{tpu_custom_call.1} parent=11 // pred_region
          %s192 = ssub.s32 2048, 2048
          %193 = vsyncadd [#allocation6], %s192
          %s194 = sshll.u32 [#allocation7], 4
          %s195 = int_to_ptr.vmem [resolvable:$true] %s194
          %200 = dma.hbm_to_vmem [thread:$0]  %s4, 2048, %s195, [#allocation6], 64, 64, 4
        $region28: #{tpu_custom_call.1} parent=11 // pred_fallthru
          _
      $region12: #{tpu_custom_call.1} parent=5 // pred_fallthru
        _
      %p201 = scmp.lt.s32.totalorder %s18, 2
      // Predicated region
      $region29: #{tpu_custom_call.1} parent=5 // pred_check
        %p202 = pneg %p201
      $region30: #{tpu_custom_call.1} parent=5 // pred_check_branch
        %204 = sbr.rel (%p202) target = $region32
      $region31: #{tpu_custom_call.1} parent=5 // pred_region
        // Predicated region
        $region33: #{tpu_custom_call.1} parent=31 // pred_check
          %p205 = pneg %p38
        $region34: #{tpu_custom_call.1} parent=31 // pred_check_branch
          %207 = sbr.rel (%p205) target = $region36
        $region35: #{tpu_custom_call.1} parent=31 // pred_region
          %s208 = sand.u32 %s28, 1
          %s209 = scalar_lea.sflag [#allocation3], %s208
          %s210 = sand.u32 %s28, 1
          %s211 = smul.addr %s210, 128
          %s212 = scalar_lea.vmem [#allocation2], %s211
          %s213 = smul.u32 16, %s18
          %s214 = ssub.s32 20, %s213
          %p215 = scmp.lt.s32.totalorder %s214, 16
          %s216 = scalar_select %p215, %s214, 16
          %s217 = smul.u32 128, %s216
          %s219 = ssub.s32 2048, %s217
          %220 = vsyncadd %s209, %s219
          %p221 = scmp.ne.s32.totalorder 0, %s217
          %s222 = smul.addr %s213, 128
          %s223 = scalar_lea.hbm %s0, %s222
          %s224 = smul.u32 8, %s216
          %s225 = sshll.u32 %s212, 4
          %s226 = int_to_ptr.vmem [resolvable:$true] %s225
          %s227 = sshll.u32 %s224, 4
          %231 = dma.hbm_to_vmem [thread:$0]  (%p221), %s223, %s227, %s226, %s209, 128, 128, 8
        $region36: #{tpu_custom_call.1} parent=31 // pred_fallthru
          _
      $region32: #{tpu_custom_call.1} parent=5 // pred_fallthru
        _
      %p232 = scmp.le.s32.totalorder 1, %s18
      %p233 = scmp.lt.s32.totalorder %s18, 3
      %p234 = pnand %p232, %p233
      %p235 = pneg %p234
      // Predicated region
      $region37: #{tpu_custom_call.1} parent=5 // pred_check
        _
      $region38: #{tpu_custom_call.1} parent=5 // pred_check_branch
        %237 = sbr.rel (%p234) target = $region40
      $region39: #{tpu_custom_call.1} parent=5 // pred_region
        %s238 = ssub.s32 %s18, 1
        %s239 = sand.u32 %s31, 1
        %s240 = scalar_lea.sflag [#allocation3], %s239
        %s241 = sand.u32 %s31, 1
        %s242 = smul.addr %s241, 128
        %s243 = scalar_lea.vmem [#allocation2], %s242
        // Predicated region
        $region41: #{tpu_custom_call.1} parent=39 // pred_check
          %p244 = pneg %p44
        $region42: #{tpu_custom_call.1} parent=39 // pred_check_branch
          %246 = sbr.rel (%p244) target = $region44
        $region43: #{tpu_custom_call.1} parent=39 // pred_region
          %247 = dma.done %s240, 2048
        $region44: #{tpu_custom_call.1} parent=39 // pred_fallthru
          _
        // Predicated region
        $region45: #{tpu_custom_call.1} parent=39 // pred_check
          %p248 = pneg %p107
        $region46: #{tpu_custom_call.1} parent=39 // pred_check_branch
          %250 = sbr.rel (%p248) target = $region48
        $region47: #{tpu_custom_call.1} parent=39 // pred_region
          %251 = dma.done [#allocation6], 4096
        $region48: #{tpu_custom_call.1} parent=39 // pred_fallthru
          _
        // Predicated region
        $region49: #{tpu_custom_call.1} parent=39 // pred_check
          %p252 = pneg %p128
        $region50: #{tpu_custom_call.1} parent=39 // pred_check_branch
          %254 = sbr.rel (%p252) target = $region52
        $region51: #{tpu_custom_call.1} parent=39 // pred_region
          %255 = dma.done [#allocation6], 2048
        $region52: #{tpu_custom_call.1} parent=39 // pred_fallthru
          _
        %s256 = sand.u32 %s31, 1
        %s257 = scalar_lea.sflag [#allocation3], %s256
        %s258 = sand.u32 %s31, 1
        %s259 = smul.addr %s258, 128
        %s260 = scalar_lea.vmem [#allocation2], %s259
        %p261 = pneg %p44
        %p262 = pneg %p41
        %p263 = pneg %p65
        %p264 = pneg %p62
        %p265 = pneg %p86
        %p266 = pneg %p83
        %p267 = pneg %p107
        %p268 = pneg %p104
        %p269 = pneg %p128
        %p270 = pneg %p125
        %p271 = pneg %p154
        %p272 = pneg %p151
        %s273 = sand.u32 %s141, 1
        %s274 = scalar_lea.sflag [#allocation4], %s273
        %s275 = sand.u32 %s141, 1
        %s276 = smul.addr %s275, 128
        %s277 = scalar_lea.vmem [#allocation8], %s276
        %s278 = smul.u32 16, %s23
        %s279 = ssub.s32 20, %s278
        %p280 = scmp.lt.s32.totalorder %s279, 16
        %s281 = scalar_select %p280, %s279, 16
        %s282 = smul.u32 128, %s281
        %s283 = smul.u32 16, %s23
        %s284 = ssub.s32 20, %s283
        %p285 = scmp.lt.s32.totalorder %s284, 16
        %s286 = scalar_select %p285, %s284, 16
        %s287 = smul.u32 128, %s286
        %v289 = vld [vmem:[%s243] sm:$0xff]
        %v290 = vld [vmem:[%s243 + $0x8] sm:$0xff]
        %v291 = vld [vmem:[%s243 + $0x10] sm:$0xff]
        %v292 = vld [vmem:[%s243 + $0x18] sm:$0xff]
        %v293 = vld [vmem:[%s243 + $0x20] sm:$0xff]
        %v294 = vld [vmem:[%s243 + $0x28] sm:$0xff]
        %v295 = vld [vmem:[%s243 + $0x30] sm:$0xff]
        %v296 = vld [vmem:[%s243 + $0x38] sm:$0xff]
        %v297 = vld [vmem:[%s243 + $0x40] sm:$0xff]
        %v298 = vld [vmem:[%s243 + $0x48] sm:$0xff]
        %v299 = vld [vmem:[%s243 + $0x50] sm:$0xff]
        %v300 = vld [vmem:[%s243 + $0x58] sm:$0xff]
        %v301 = vld [vmem:[%s243 + $0x60] sm:$0xff]
        %v302 = vld [vmem:[%s243 + $0x68] sm:$0xff]
        %v303 = vld [vmem:[%s243 + $0x70] sm:$0xff]
        %v304 = vld [vmem:[%s243 + $0x78] sm:$0xff]
        %305 = vadd.xlane.f32.xlu0 %v289
        %v306 = vpop.xlane.xlu0 %305
        %307 = vadd.xlane.f32.xlu0 %v290
        %v308 = vpop.xlane.xlu0 %307
        %309 = vadd.xlane.f32.xlu0 %v291
        %v310 = vpop.xlane.xlu0 %309
        %311 = vadd.xlane.f32.xlu0 %v292
        %v312 = vpop.xlane.xlu0 %311
        %313 = vadd.xlane.f32.xlu0 %v293
        %v314 = vpop.xlane.xlu0 %313
        %315 = vadd.xlane.f32.xlu0 %v294
        %v316 = vpop.xlane.xlu0 %315
        %317 = vadd.xlane.f32.xlu0 %v295
        %v318 = vpop.xlane.xlu0 %317
        %319 = vadd.xlane.f32.xlu0 %v296
        %v320 = vpop.xlane.xlu0 %319
        %321 = vadd.xlane.f32.xlu0 %v297
        %v322 = vpop.xlane.xlu0 %321
        %323 = vadd.xlane.f32.xlu0 %v298
        %v324 = vpop.xlane.xlu0 %323
        %325 = vadd.xlane.f32.xlu0 %v299
        %v326 = vpop.xlane.xlu0 %325
        %327 = vadd.xlane.f32.xlu0 %v300
        %v328 = vpop.xlane.xlu0 %327
        %329 = vadd.xlane.f32.xlu0 %v301
        %v330 = vpop.xlane.xlu0 %329
        %331 = vadd.xlane.f32.xlu0 %v302
        %v332 = vpop.xlane.xlu0 %331
        %333 = vadd.xlane.f32.xlu0 %v303
        %v334 = vpop.xlane.xlu0 %333
        %335 = vadd.xlane.f32.xlu0 %v304
        %v336 = vpop.xlane.xlu0 %335
        %v337 = vrcp.pop 128.0
        %v338 = vmul.f32 %v306, %v337
        %v339 = vmul.f32 %v308, %v337
        %v340 = vmul.f32 %v310, %v337
        %v341 = vmul.f32 %v312, %v337
        %v342 = vmul.f32 %v314, %v337
        %v343 = vmul.f32 %v316, %v337
        %v344 = vmul.f32 %v318, %v337
        %v345 = vmul.f32 %v320, %v337
        %v346 = vmul.f32 %v322, %v337
        %v347 = vmul.f32 %v324, %v337
        %v348 = vmul.f32 %v326, %v337
        %v349 = vmul.f32 %v328, %v337
        %v350 = vmul.f32 %v330, %v337
        %v351 = vmul.f32 %v332, %v337
        %v352 = vmul.f32 %v334, %v337
        %v353 = vmul.f32 %v336, %v337
        %v354 = vsub.f32 %v289, %v338
        %v355 = vsub.f32 %v290, %v339
        %v356 = vsub.f32 %v291, %v340
        %v357 = vsub.f32 %v292, %v341
        %v358 = vsub.f32 %v293, %v342
        %v359 = vsub.f32 %v294, %v343
        %v360 = vsub.f32 %v295, %v344
        %v361 = vsub.f32 %v296, %v345
        %v362 = vsub.f32 %v297, %v346
        %v363 = vsub.f32 %v298, %v347
        %v364 = vsub.f32 %v299, %v348
        %v365 = vsub.f32 %v300, %v349
        %v366 = vsub.f32 %v301, %v350
        %v367 = vsub.f32 %v302, %v351
        %v368 = vsub.f32 %v303, %v352
        %v369 = vsub.f32 %v304, %v353
        %v370 = vmul.f32 %v354, %v354
        %v371 = vmul.f32 %v355, %v355
        %v372 = vmul.f32 %v356, %v356
        %v373 = vmul.f32 %v357, %v357
        %v374 = vmul.f32 %v358, %v358
        %v375 = vmul.f32 %v359, %v359
        %v376 = vmul.f32 %v360, %v360
        %v377 = vmul.f32 %v361, %v361
        %v378 = vmul.f32 %v362, %v362
        %v379 = vmul.f32 %v363, %v363
        %v380 = vmul.f32 %v364, %v364
        %v381 = vmul.f32 %v365, %v365
        %v382 = vmul.f32 %v366, %v366
        %v383 = vmul.f32 %v367, %v367
        %v384 = vmul.f32 %v368, %v368
        %v385 = vmul.f32 %v369, %v369
        %386 = vadd.xlane.f32.xlu0 %v370
        %v387 = vpop.xlane.xlu0 %386
        %388 = vadd.xlane.f32.xlu0 %v371
        %v389 = vpop.xlane.xlu0 %388
        %390 = vadd.xlane.f32.xlu0 %v372
        %v391 = vpop.xlane.xlu0 %390
        %392 = vadd.xlane.f32.xlu0 %v373
        %v393 = vpop.xlane.xlu0 %392
        %394 = vadd.xlane.f32.xlu0 %v374
        %v395 = vpop.xlane.xlu0 %394
        %396 = vadd.xlane.f32.xlu0 %v375
        %v397 = vpop.xlane.xlu0 %396
        %398 = vadd.xlane.f32.xlu0 %v376
        %v399 = vpop.xlane.xlu0 %398
        %400 = vadd.xlane.f32.xlu0 %v377
        %v401 = vpop.xlane.xlu0 %400
        %402 = vadd.xlane.f32.xlu0 %v378
        %v403 = vpop.xlane.xlu0 %402
        %404 = vadd.xlane.f32.xlu0 %v379
        %v405 = vpop.xlane.xlu0 %404
        %406 = vadd.xlane.f32.xlu0 %v380
        %v407 = vpop.xlane.xlu0 %406
        %408 = vadd.xlane.f32.xlu0 %v381
        %v409 = vpop.xlane.xlu0 %408
        %410 = vadd.xlane.f32.xlu0 %v382
        %v411 = vpop.xlane.xlu0 %410
        %412 = vadd.xlane.f32.xlu0 %v383
        %v413 = vpop.xlane.xlu0 %412
        %414 = vadd.xlane.f32.xlu0 %v384
        %v415 = vpop.xlane.xlu0 %414
        %416 = vadd.xlane.f32.xlu0 %v385
        %v417 = vpop.xlane.xlu0 %416
        %v418 = vmul.f32 %v387, %v337
        %v419 = vmul.f32 %v389, %v337
        %v420 = vmul.f32 %v391, %v337
        %v421 = vmul.f32 %v393, %v337
        %v422 = vmul.f32 %v395, %v337
        %v423 = vmul.f32 %v397, %v337
        %v424 = vmul.f32 %v399, %v337
        %v425 = vmul.f32 %v401, %v337
        %v426 = vmul.f32 %v403, %v337
        %v427 = vmul.f32 %v405, %v337
        %v428 = vmul.f32 %v407, %v337
        %v429 = vmul.f32 %v409, %v337
        %v430 = vmul.f32 %v411, %v337
        %v431 = vmul.f32 %v413, %v337
        %v432 = vmul.f32 %v415, %v337
        %v433 = vmul.f32 %v417, %v337
        %v434 = vadd.f32 %v418, 1e-05
        %v435 = vadd.f32 %v419, 1e-05
        %v436 = vadd.f32 %v420, 1e-05
        %v437 = vadd.f32 %v421, 1e-05
        %v438 = vadd.f32 %v422, 1e-05
        %v439 = vadd.f32 %v423, 1e-05
        %v440 = vadd.f32 %v424, 1e-05
        %v441 = vadd.f32 %v425, 1e-05
        %v442 = vadd.f32 %v426, 1e-05
        %v443 = vadd.f32 %v427, 1e-05
        %v444 = vadd.f32 %v428, 1e-05
        %v445 = vadd.f32 %v429, 1e-05
        %v446 = vadd.f32 %v430, 1e-05
        %v447 = vadd.f32 %v431, 1e-05
        %v448 = vadd.f32 %v432, 1e-05
        %v449 = vadd.f32 %v433, 1e-05
        %v450 = vrsqrt.pop %v434
        %v451 = vrsqrt.pop %v435
        %v452 = vrsqrt.pop %v436
        %v453 = vrsqrt.pop %v437
        %v454 = vrsqrt.pop %v438
        %v455 = vrsqrt.pop %v439
        %v456 = vrsqrt.pop %v440
        %v457 = vrsqrt.pop %v441
        %v458 = vrsqrt.pop %v442
        %v459 = vrsqrt.pop %v443
        %v460 = vrsqrt.pop %v444
        %v461 = vrsqrt.pop %v445
        %v462 = vrsqrt.pop %v446
        %v463 = vrsqrt.pop %v447
        %v464 = vrsqrt.pop %v448
        %v465 = vrsqrt.pop %v449
        %v466 = vmul.f32 %v354, %v450
        %v467 = vmul.f32 %v355, %v451
        %v468 = vmul.f32 %v356, %v452
        %v469 = vmul.f32 %v357, %v453
        %v470 = vmul.f32 %v358, %v454
        %v471 = vmul.f32 %v359, %v455
        %v472 = vmul.f32 %v360, %v456
        %v473 = vmul.f32 %v361, %v457
        %v474 = vmul.f32 %v362, %v458
        %v475 = vmul.f32 %v363, %v459
        %v476 = vmul.f32 %v364, %v460
        %v477 = vmul.f32 %v365, %v461
        %v478 = vmul.f32 %v366, %v462
        %v479 = vmul.f32 %v367, %v463
        %v480 = vmul.f32 %v368, %v464
        %v481 = vmul.f32 %v369, %v465
        %v482 = vld [vmem:[%s1] sm:$0x1]
        %v484 = vlaneseq
        %v485 = vshrl.u32 %v484, 7
        %v486 = vsub.s32 0, %v485
        %v487 = vrot.slane %v482, %v486
        %v489 = vmul.f32 %v466, %v487
        %v490 = vmul.f32 %v467, %v487
        %v491 = vmul.f32 %v468, %v487
        %v492 = vmul.f32 %v469, %v487
        %v493 = vmul.f32 %v470, %v487
        %v494 = vmul.f32 %v471, %v487
        %v495 = vmul.f32 %v472, %v487
        %v496 = vmul.f32 %v473, %v487
        %v497 = vmul.f32 %v474, %v487
        %v498 = vmul.f32 %v475, %v487
        %v499 = vmul.f32 %v476, %v487
        %v500 = vmul.f32 %v477, %v487
        %v501 = vmul.f32 %v478, %v487
        %v502 = vmul.f32 %v479, %v487
        %v503 = vmul.f32 %v480, %v487
        %v504 = vmul.f32 %v481, %v487
        %v505 = vld [vmem:[%s2] sm:$0x1]
        %v507 = vlaneseq
        %v508 = vshrl.u32 %v507, 7
        %v509 = vsub.s32 0, %v508
        %v510 = vrot.slane %v505, %v509
        %v512 = vadd.f32 %v489, %v510
        %v513 = vadd.f32 %v490, %v510
        %v514 = vadd.f32 %v491, %v510
        %v515 = vadd.f32 %v492, %v510
        %v516 = vadd.f32 %v493, %v510
        %v517 = vadd.f32 %v494, %v510
        %v518 = vadd.f32 %v495, %v510
        %v519 = vadd.f32 %v496, %v510
        %v520 = vadd.f32 %v497, %v510
        %v521 = vadd.f32 %v498, %v510
        %v522 = vadd.f32 %v499, %v510
        %v523 = vadd.f32 %v500, %v510
        %v524 = vadd.f32 %v501, %v510
        %v525 = vadd.f32 %v502, %v510
        %v526 = vadd.f32 %v503, %v510
        %v527 = vadd.f32 %v504, %v510
        %v528 = vpack.c.bf16 %v513, %v512
        %v529 = vpack.c.bf16 %v515, %v514
        %v530 = vpack.c.bf16 %v517, %v516
        %v531 = vpack.c.bf16 %v519, %v518
        %v532 = vpack.c.bf16 %v521, %v520
        %v533 = vpack.c.bf16 %v523, %v522
        %v534 = vpack.c.bf16 %v525, %v524
        %v535 = vpack.c.bf16 %v527, %v526
        %v536 = vld [vmem:[#allocation5] sm:$0xff]
        %v537 = vld [vmem:[#allocation5 + $0x8] sm:$0xff]
        %v538 = vld [vmem:[#allocation5 + $0x10] sm:$0xff]
        %v539 = vld [vmem:[#allocation5 + $0x18] sm:$0xff]
        %v540 = vld [vmem:[#allocation5 + $0x20] sm:$0xff]
        %v541 = vld [vmem:[#allocation5 + $0x28] sm:$0xff]
        %v542 = vld [vmem:[#allocation5 + $0x30] sm:$0xff]
        %v543 = vld [vmem:[#allocation5 + $0x38] sm:$0xff]
        %v544 = vld [vmem:[#allocation5 + $0x40] sm:$0xff]
        %v545 = vld [vmem:[#allocation5 + $0x48] sm:$0xff]
        %v546 = vld [vmem:[#allocation5 + $0x50] sm:$0xff]
        %v547 = vld [vmem:[#allocation5 + $0x58] sm:$0xff]
        %v548 = vld [vmem:[#allocation5 + $0x60] sm:$0xff]
        %v549 = vld [vmem:[#allocation5 + $0x68] sm:$0xff]
        %v550 = vld [vmem:[#allocation5 + $0x70] sm:$0xff]
        %v551 = vld [vmem:[#allocation5 + $0x78] sm:$0xff]
        %v552 = vld [vmem:[#allocation5 + $0x80] sm:$0xff]
        %v553 = vld [vmem:[#allocation5 + $0x88] sm:$0xff]
        %v554 = vld [vmem:[#allocation5 + $0x90] sm:$0xff]
        %v555 = vld [vmem:[#allocation5 + $0x98] sm:$0xff]
        %v556 = vld [vmem:[#allocation5 + $0xa0] sm:$0xff]
        %v557 = vld [vmem:[#allocation5 + $0xa8] sm:$0xff]
        %v558 = vld [vmem:[#allocation5 + $0xb0] sm:$0xff]
        %v559 = vld [vmem:[#allocation5 + $0xb8] sm:$0xff]
        %v560 = vld [vmem:[#allocation5 + $0xc0] sm:$0xff]
        %v561 = vld [vmem:[#allocation5 + $0xc8] sm:$0xff]
        %v562 = vld [vmem:[#allocation5 + $0xd0] sm:$0xff]
        %v563 = vld [vmem:[#allocation5 + $0xd8] sm:$0xff]
        %v564 = vld [vmem:[#allocation5 + $0xe0] sm:$0xff]
        %v565 = vld [vmem:[#allocation5 + $0xe8] sm:$0xff]
        %v566 = vld [vmem:[#allocation5 + $0xf0] sm:$0xff]
        %v567 = vld [vmem:[#allocation5 + $0xf8] sm:$0xff]
        %v600 = vunpack.c.l.b16 %v536
        %v601 = vunpack.c.h.b16 %v536
        %v602 = vunpack.c.l.b16 %v537
        %v603 = vunpack.c.h.b16 %v537
        %v604 = vunpack.c.l.b16 %v538
        %v605 = vunpack.c.h.b16 %v538
        %v606 = vunpack.c.l.b16 %v539
        %v607 = vunpack.c.h.b16 %v539
        %v608 = vunpack.c.l.b16 %v540
        %v609 = vunpack.c.h.b16 %v540
        %v610 = vunpack.c.l.b16 %v541
        %v611 = vunpack.c.h.b16 %v541
        %v612 = vunpack.c.l.b16 %v542
        %v613 = vunpack.c.h.b16 %v542
        %v614 = vunpack.c.l.b16 %v543
        %v615 = vunpack.c.h.b16 %v543
        %v616 = vunpack.c.l.b16 %v544
        %v617 = vunpack.c.h.b16 %v544
        %v618 = vunpack.c.l.b16 %v545
        %v619 = vunpack.c.h.b16 %v545
        %v620 = vunpack.c.l.b16 %v546
        %v621 = vunpack.c.h.b16 %v546
        %v622 = vunpack.c.l.b16 %v547
        %v623 = vunpack.c.h.b16 %v547
        %v624 = vunpack.c.l.b16 %v548
        %v625 = vunpack.c.h.b16 %v548
        %v626 = vunpack.c.l.b16 %v549
        %v627 = vunpack.c.h.b16 %v549
        %v628 = vunpack.c.l.b16 %v550
        %v629 = vunpack.c.h.b16 %v550
        %v630 = vunpack.c.l.b16 %v551
        %v631 = vunpack.c.h.b16 %v551
        %v632 = vunpack.c.l.b16 %v552
        %v633 = vunpack.c.h.b16 %v552
        %v634 = vunpack.c.l.b16 %v553
        %v635 = vunpack.c.h.b16 %v553
        %v636 = vunpack.c.l.b16 %v554
        %v637 = vunpack.c.h.b16 %v554
        %v638 = vunpack.c.l.b16 %v555
        %v639 = vunpack.c.h.b16 %v555
        %v640 = vunpack.c.l.b16 %v556
        %v641 = vunpack.c.h.b16 %v556
        %v642 = vunpack.c.l.b16 %v557
        %v643 = vunpack.c.h.b16 %v557
        %v644 = vunpack.c.l.b16 %v558
        %v645 = vunpack.c.h.b16 %v558
        %v646 = vunpack.c.l.b16 %v559
        %v647 = vunpack.c.h.b16 %v559
        %v648 = vunpack.c.l.b16 %v560
        %v649 = vunpack.c.h.b16 %v560
        %v650 = vunpack.c.l.b16 %v561
        %v651 = vunpack.c.h.b16 %v561
        %v652 = vunpack.c.l.b16 %v562
        %v653 = vunpack.c.h.b16 %v562
        %v654 = vunpack.c.l.b16 %v563
        %v655 = vunpack.c.h.b16 %v563
        %v656 = vunpack.c.l.b16 %v564
        %v657 = vunpack.c.h.b16 %v564
        %v658 = vunpack.c.l.b16 %v565
        %v659 = vunpack.c.h.b16 %v565
        %v660 = vunpack.c.l.b16 %v566
        %v661 = vunpack.c.h.b16 %v566
        %v662 = vunpack.c.l.b16 %v567
        %v663 = vunpack.c.h.b16 %v567
        %v664 = vpack.c.b16 %v604, %v600
        %v665 = vpack.c.b16 %v605, %v601
        %v666 = vpack.c.b16 %v606, %v602
        %v667 = vpack.c.b16 %v607, %v603
        %v668 = vpack.c.b16 %v612, %v608
        %v669 = vpack.c.b16 %v613, %v609
        %v670 = vpack.c.b16 %v614, %v610
        %v671 = vpack.c.b16 %v615, %v611
        %v672 = vpack.c.b16 %v620, %v616
        %v673 = vpack.c.b16 %v621, %v617
        %v674 = vpack.c.b16 %v622, %v618
        %v675 = vpack.c.b16 %v623, %v619
        %v676 = vpack.c.b16 %v628, %v624
        %v677 = vpack.c.b16 %v629, %v625
        %v678 = vpack.c.b16 %v630, %v626
        %v679 = vpack.c.b16 %v631, %v627
        %v680 = vpack.c.b16 %v636, %v632
        %v681 = vpack.c.b16 %v637, %v633
        %v682 = vpack.c.b16 %v638, %v634
        %v683 = vpack.c.b16 %v639, %v635
        %v684 = vpack.c.b16 %v644, %v640
        %v685 = vpack.c.b16 %v645, %v641
        %v686 = vpack.c.b16 %v646, %v642
        %v687 = vpack.c.b16 %v647, %v643
        %v688 = vpack.c.b16 %v652, %v648
        %v689 = vpack.c.b16 %v653, %v649
        %v690 = vpack.c.b16 %v654, %v650
        %v691 = vpack.c.b16 %v655, %v651
        %v692 = vpack.c.b16 %v660, %v656
        %v693 = vpack.c.b16 %v661, %v657
        %v694 = vpack.c.b16 %v662, %v658
        %v695 = vpack.c.b16 %v663, %v659
        %728 = vmatprep.subr.bf16.mxu0 %v665
        %729 = vmatpush1.bf16.msra.mxu0 %v664
        %730 = vmatprep.subr.bf16.mxu0 %v669
        %731 = vmatpush1.bf16.msra.mxu0 %v668
        %732 = vmatprep.subr.bf16.mxu0 %v673
        %733 = vmatpush1.bf16.msra.mxu0 %v672
        %734 = vmatprep.subr.bf16.mxu0 %v677
        %735 = vmatpush1.bf16.msra.mxu0 %v676
        %736 = vmatprep.subr.bf16.mxu0 %v681
        %737 = vmatpush1.bf16.msra.mxu0 %v680
        %738 = vmatprep.subr.bf16.mxu0 %v685
        %739 = vmatpush1.bf16.msra.mxu0 %v684
        %740 = vmatprep.subr.bf16.mxu0 %v689
        %741 = vmatpush1.bf16.msra.mxu0 %v688
        %742 = vmatprep.subr.bf16.mxu0 %v693
        %743 = vmatpush1.bf16.msra.mxu0 %v692
        %744 = vmatprep.subr.bf16.mxu0 0
        %745 = vmatpush1.bf16.msra.mxu0 0
        %746 = vmatprep.subr.bf16.mxu0 0
        %747 = vmatpush1.bf16.msra.mxu0 0
        %748 = vmatprep.subr.bf16.mxu0 0
        %749 = vmatpush1.bf16.msra.mxu0 0
        %750 = vmatprep.subr.bf16.mxu0 0
        %751 = vmatpush1.bf16.msra.mxu0 0
        %752 = vmatprep.subr.bf16.mxu0 0
        %753 = vmatpush1.bf16.msra.mxu0 0
        %754 = vmatprep.subr.bf16.mxu0 0
        %755 = vmatpush1.bf16.msra.mxu0 0
        %756 = vmatprep.subr.bf16.mxu0 0
        %757 = vmatpush1.bf16.msra.mxu0 0
        %758 = vmatprep.subr.bf16.mxu0 0
        %759 = vmatpush1.bf16.msra.mxu0 0
        %760 = vmatprep.mubr.bf16.mxu0 0
        %761 = vmatmul.mubr.bf16.gmra.mrb[0].mxu0 %v528
        %v762 = vpop.f32.mrb[0].mxu0
        %v763 = vadd.f32 0.0, %v762
        %v764 = vpop.f32.mrb[0].mxu0
        %v765 = vadd.f32 0.0, %v764
        %v766 = vpop.f32.mrb[0].mxu0
        %v767 = vadd.f32 0.0, %v766
        %v768 = vpop.f32.mrb[0].mxu0
        %v769 = vadd.f32 0.0, %v768
        %770 = vmatprep.mubr.bf16.mxu0 0
        %771 = vmatmul.mubr.bf16.gmra.mrb[0].mxu0 %v529
        %v772 = vpop.f32.mrb[0].mxu0
        %v773 = vadd.f32 0.0, %v772
        %v774 = vpop.f32.mrb[0].mxu0
        %v775 = vadd.f32 0.0, %v774
        %v776 = vpop.f32.mrb[0].mxu0
        %v777 = vadd.f32 0.0, %v776
        %v778 = vpop.f32.mrb[0].mxu0
        %v779 = vadd.f32 0.0, %v778
        %780 = vmatprep.mubr.bf16.mxu0 0
        %781 = vmatmul.mubr.bf16.gmra.mrb[0].mxu0 %v530
        %v782 = vpop.f32.mrb[0].mxu0
        %v783 = vadd.f32 0.0, %v782
        %v784 = vpop.f32.mrb[0].mxu0
        %v785 = vadd.f32 0.0, %v784
        %v786 = vpop.f32.mrb[0].mxu0
        %v787 = vadd.f32 0.0, %v786
        %v788 = vpop.f32.mrb[0].mxu0
        %v789 = vadd.f32 0.0, %v788
        %790 = vmatprep.mubr.bf16.mxu0 0
        %791 = vmatmul.mubr.bf16.gmra.mrb[0].mxu0 %v531
        %v792 = vpop.f32.mrb[0].mxu0
        %v793 = vadd.f32 0.0, %v792
        %v794 = vpop.f32.mrb[0].mxu0
        %v795 = vadd.f32 0.0, %v794
        %v796 = vpop.f32.mrb[0].mxu0
        %v797 = vadd.f32 0.0, %v796
        %v798 = vpop.f32.mrb[0].mxu0
        %v799 = vadd.f32 0.0, %v798
        %800 = vmatprep.mubr.bf16.mxu0 0
        %801 = vmatmul.mubr.bf16.gmra.mrb[0].mxu0 %v532
        %v802 = vpop.f32.mrb[0].mxu0
        %v803 = vadd.f32 0.0, %v802
        %v804 = vpop.f32.mrb[0].mxu0
        %v805 = vadd.f32 0.0, %v804
        %v806 = vpop.f32.mrb[0].mxu0
        %v807 = vadd.f32 0.0, %v806
        %v808 = vpop.f32.mrb[0].mxu0
        %v809 = vadd.f32 0.0, %v808
        %810 = vmatprep.mubr.bf16.mxu0 0
        %811 = vmatmul.mubr.bf16.gmra.mrb[0].mxu0 %v533
        %v812 = vpop.f32.mrb[0].mxu0
        %v813 = vadd.f32 0.0, %v812
        %v814 = vpop.f32.mrb[0].mxu0
        %v815 = vadd.f32 0.0, %v814
        %v816 = vpop.f32.mrb[0].mxu0
        %v817 = vadd.f32 0.0, %v816
        %v818 = vpop.f32.mrb[0].mxu0
        %v819 = vadd.f32 0.0, %v818
        %820 = vmatprep.mubr.bf16.mxu0 0
        %821 = vmatmul.mubr.bf16.gmra.mrb[0].mxu0 %v534
        %v822 = vpop.f32.mrb[0].mxu0
        %v823 = vadd.f32 0.0, %v822
        %v824 = vpop.f32.mrb[0].mxu0
        %v825 = vadd.f32 0.0, %v824
        %v826 = vpop.f32.mrb[0].mxu0
        %v827 = vadd.f32 0.0, %v826
        %v828 = vpop.f32.mrb[0].mxu0
        %v829 = vadd.f32 0.0, %v828
        %830 = vmatprep.mubr.bf16.mxu0 0
        %831 = vmatmul.mubr.bf16.gmra.mrb[0].mxu0 %v535
        %v832 = vpop.f32.mrb[0].mxu0
        %v833 = vadd.f32 0.0, %v832
        %v834 = vpop.f32.mrb[0].mxu0
        %v835 = vadd.f32 0.0, %v834
        %v836 = vpop.f32.mrb[0].mxu0
        %v837 = vadd.f32 0.0, %v836
        %v838 = vpop.f32.mrb[0].mxu0
        %v839 = vadd.f32 0.0, %v838
        %840 = vdwg.mxu0
        %841 = vmatprep.subr.bf16.mxu0 %v667
        %842 = vmatpush1.bf16.msra.mxu0 %v666
        %843 = vmatprep.subr.bf16.mxu0 %v671
        %844 = vmatpush1.bf16.msra.mxu0 %v670
        %845 = vmatprep.subr.bf16.mxu0 %v675
        %846 = vmatpush1.bf16.msra.mxu0 %v674
        %847 = vmatprep.subr.bf16.mxu0 %v679
        %848 = vmatpush1.bf16.msra.mxu0 %v678
        %849 = vmatprep.subr.bf16.mxu0 %v683
        %850 = vmatpush1.bf16.msra.mxu0 %v682
        %851 = vmatprep.subr.bf16.mxu0 %v687
        %852 = vmatpush1.bf16.msra.mxu0 %v686
        %853 = vmatprep.subr.bf16.mxu0 %v691
        %854 = vmatpush1.bf16.msra.mxu0 %v690
        %855 = vmatprep.subr.bf16.mxu0 %v695
        %856 = vmatpush1.bf16.msra.mxu0 %v694
        %857 = vmatprep.subr.bf16.mxu0 0
        %858 = vmatpush1.bf16.msra.mxu0 0
        %859 = vmatprep.subr.bf16.mxu0 0
        %860 = vmatpush1.bf16.msra.mxu0 0
        %861 = vmatprep.subr.bf16.mxu0 0
        %862 = vmatpush1.bf16.msra.mxu0 0
        %863 = vmatprep.subr.bf16.mxu0 0
        %864 = vmatpush1.bf16.msra.mxu0 0
        %865 = vmatprep.subr.bf16.mxu0 0
        %866 = vmatpush1.bf16.msra.mxu0 0
        %867 = vmatprep.subr.bf16.mxu0 0
        %868 = vmatpush1.bf16.msra.mxu0 0
        %869 = vmatprep.subr.bf16.mxu0 0
        %870 = vmatpush1.bf16.msra.mxu0 0
        %871 = vmatprep.subr.bf16.mxu0 0
        %872 = vmatpush1.bf16.msra.mxu0 0
        %873 = vmatprep.mubr.bf16.mxu0 0
        %874 = vmatmul.mubr.bf16.gmra.mrb[0].mxu0 %v528
        %v875 = vpop.f32.mrb[0].mxu0
        %v876 = vadd.f32 0.0, %v875
        %v877 = vpop.f32.mrb[0].mxu0
        %v878 = vadd.f32 0.0, %v877
        %v879 = vpop.f32.mrb[0].mxu0
        %v880 = vadd.f32 0.0, %v879
        %v881 = vpop.f32.mrb[0].mxu0
        %v882 = vadd.f32 0.0, %v881
        %883 = vmatprep.mubr.bf16.mxu0 0
        %884 = vmatmul.mubr.bf16.gmra.mrb[0].mxu0 %v529
        %v885 = vpop.f32.mrb[0].mxu0
        %v886 = vadd.f32 0.0, %v885
        %v887 = vpop.f32.mrb[0].mxu0
        %v888 = vadd.f32 0.0, %v887
        %v889 = vpop.f32.mrb[0].mxu0
        %v890 = vadd.f32 0.0, %v889
        %v891 = vpop.f32.mrb[0].mxu0
        %v892 = vadd.f32 0.0, %v891
        %893 = vmatprep.mubr.bf16.mxu0 0
        %894 = vmatmul.mubr.bf16.gmra.mrb[0].mxu0 %v530
        %v895 = vpop.f32.mrb[0].mxu0
        %v896 = vadd.f32 0.0, %v895
        %v897 = vpop.f32.mrb[0].mxu0
        %v898 = vadd.f32 0.0, %v897
        %v899 = vpop.f32.mrb[0].mxu0
        %v900 = vadd.f32 0.0, %v899
        %v901 = vpop.f32.mrb[0].mxu0
        %v902 = vadd.f32 0.0, %v901
        %903 = vmatprep.mubr.bf16.mxu0 0
        %904 = vmatmul.mubr.bf16.gmra.mrb[0].mxu0 %v531
        %v905 = vpop.f32.mrb[0].mxu0
        %v906 = vadd.f32 0.0, %v905
        %v907 = vpop.f32.mrb[0].mxu0
        %v908 = vadd.f32 0.0, %v907
        %v909 = vpop.f32.mrb[0].mxu0
        %v910 = vadd.f32 0.0, %v909
        %v911 = vpop.f32.mrb[0].mxu0
        %v912 = vadd.f32 0.0, %v911
        %913 = vmatprep.mubr.bf16.mxu0 0
        %914 = vmatmul.mubr.bf16.gmra.mrb[0].mxu0 %v532
        %v915 = vpop.f32.mrb[0].mxu0
        %v916 = vadd.f32 0.0, %v915
        %v917 = vpop.f32.mrb[0].mxu0
        %v918 = vadd.f32 0.0, %v917
        %v919 = vpop.f32.mrb[0].mxu0
        %v920 = vadd.f32 0.0, %v919
        %v921 = vpop.f32.mrb[0].mxu0
        %v922 = vadd.f32 0.0, %v921
        %923 = vmatprep.mubr.bf16.mxu0 0
        %924 = vmatmul.mubr.bf16.gmra.mrb[0].mxu0 %v533
        %v925 = vpop.f32.mrb[0].mxu0
        %v926 = vadd.f32 0.0, %v925
        %v927 = vpop.f32.mrb[0].mxu0
        %v928 = vadd.f32 0.0, %v927
        %v929 = vpop.f32.mrb[0].mxu0
        %v930 = vadd.f32 0.0, %v929
        %v931 = vpop.f32.mrb[0].mxu0
        %v932 = vadd.f32 0.0, %v931
        %933 = vmatprep.mubr.bf16.mxu0 0
        %934 = vmatmul.mubr.bf16.gmra.mrb[0].mxu0 %v534
        %v935 = vpop.f32.mrb[0].mxu0
        %v936 = vadd.f32 0.0, %v935
        %v937 = vpop.f32.mrb[0].mxu0
        %v938 = vadd.f32 0.0, %v937
        %v939 = vpop.f32.mrb[0].mxu0
        %v940 = vadd.f32 0.0, %v939
        %v941 = vpop.f32.mrb[0].mxu0
        %v942 = vadd.f32 0.0, %v941
        %943 = vmatprep.mubr.bf16.mxu0 0
        %944 = vmatmul.mubr.bf16.gmra.mrb[0].mxu0 %v535
        %v945 = vpop.f32.mrb[0].mxu0
        %v946 = vadd.f32 0.0, %v945
        %v947 = vpop.f32.mrb[0].mxu0
        %v948 = vadd.f32 0.0, %v947
        %v949 = vpop.f32.mrb[0].mxu0
        %v950 = vadd.f32 0.0, %v949
        %v951 = vpop.f32.mrb[0].mxu0
        %v952 = vadd.f32 0.0, %v951
        %953 = vdwg.mxu0
        %v954 = vxor.u32 %v876, 2147483648
        %v955 = vxor.u32 %v878, 2147483648
        %v956 = vxor.u32 %v880, 2147483648
        %v957 = vxor.u32 %v882, 2147483648
        %v958 = vxor.u32 %v886, 2147483648
        %v959 = vxor.u32 %v888, 2147483648
        %v960 = vxor.u32 %v890, 2147483648
        %v961 = vxor.u32 %v892, 2147483648
        %v962 = vxor.u32 %v896, 2147483648
        %v963 = vxor.u32 %v898, 2147483648
        %v964 = vxor.u32 %v900, 2147483648
        %v965 = vxor.u32 %v902, 2147483648
        %v966 = vxor.u32 %v906, 2147483648
        %v967 = vxor.u32 %v908, 2147483648
        %v968 = vxor.u32 %v910, 2147483648
        %v969 = vxor.u32 %v912, 2147483648
        %v970 = vxor.u32 %v916, 2147483648
        %v971 = vxor.u32 %v918, 2147483648
        %v972 = vxor.u32 %v920, 2147483648
        %v973 = vxor.u32 %v922, 2147483648
        %v974 = vxor.u32 %v926, 2147483648
        %v975 = vxor.u32 %v928, 2147483648
        %v976 = vxor.u32 %v930, 2147483648
        %v977 = vxor.u32 %v932, 2147483648
        %v978 = vxor.u32 %v936, 2147483648
        %v979 = vxor.u32 %v938, 2147483648
        %v980 = vxor.u32 %v940, 2147483648
        %v981 = vxor.u32 %v942, 2147483648
        %v982 = vxor.u32 %v946, 2147483648
        %v983 = vxor.u32 %v948, 2147483648
        %v984 = vxor.u32 %v950, 2147483648
        %v985 = vxor.u32 %v952, 2147483648
        %v986 = vmul.f32 %v954, 1.442695
        %v987 = vpow.pop %v986
        %v988 = vmul.f32 %v955, 1.442695
        %v989 = vpow.pop %v988
        %v990 = vmul.f32 %v956, 1.442695
        %v991 = vpow.pop %v990
        %v992 = vmul.f32 %v957, 1.442695
        %v993 = vpow.pop %v992
        %v994 = vmul.f32 %v958, 1.442695
        %v995 = vpow.pop %v994
        %v996 = vmul.f32 %v959, 1.442695
        %v997 = vpow.pop %v996
        %v998 = vmul.f32 %v960, 1.442695
        %v999 = vpow.pop %v998
        %v1000 = vmul.f32 %v961, 1.442695
        %v1001 = vpow.pop %v1000
        %v1002 = vmul.f32 %v962, 1.442695
        %v1003 = vpow.pop %v1002
        %v1004 = vmul.f32 %v963, 1.442695
        %v1005 = vpow.pop %v1004
        %v1006 = vmul.f32 %v964, 1.442695
        %v1007 = vpow.pop %v1006
        %v1008 = vmul.f32 %v965, 1.442695
        %v1009 = vpow.pop %v1008
        %v1010 = vmul.f32 %v966, 1.442695
        %v1011 = vpow.pop %v1010
        %v1012 = vmul.f32 %v967, 1.442695
        %v1013 = vpow.pop %v1012
        %v1014 = vmul.f32 %v968, 1.442695
        %v1015 = vpow.pop %v1014
        %v1016 = vmul.f32 %v969, 1.442695
        %v1017 = vpow.pop %v1016
        %v1018 = vmul.f32 %v970, 1.442695
        %v1019 = vpow.pop %v1018
        %v1020 = vmul.f32 %v971, 1.442695
        %v1021 = vpow.pop %v1020
        %v1022 = vmul.f32 %v972, 1.442695
        %v1023 = vpow.pop %v1022
        %v1024 = vmul.f32 %v973, 1.442695
        %v1025 = vpow.pop %v1024
        %v1026 = vmul.f32 %v974, 1.442695
        %v1027 = vpow.pop %v1026
        %v1028 = vmul.f32 %v975, 1.442695
        %v1029 = vpow.pop %v1028
        %v1030 = vmul.f32 %v976, 1.442695
        %v1031 = vpow.pop %v1030
        %v1032 = vmul.f32 %v977, 1.442695
        %v1033 = vpow.pop %v1032
        %v1034 = vmul.f32 %v978, 1.442695
        %v1035 = vpow.pop %v1034
        %v1036 = vmul.f32 %v979, 1.442695
        %v1037 = vpow.pop %v1036
        %v1038 = vmul.f32 %v980, 1.442695
        %v1039 = vpow.pop %v1038
        %v1040 = vmul.f32 %v981, 1.442695
        %v1041 = vpow.pop %v1040
        %v1042 = vmul.f32 %v982, 1.442695
        %v1043 = vpow.pop %v1042
        %v1044 = vmul.f32 %v983, 1.442695
        %v1045 = vpow.pop %v1044
        %v1046 = vmul.f32 %v984, 1.442695
        %v1047 = vpow.pop %v1046
        %v1048 = vmul.f32 %v985, 1.442695
        %v1049 = vpow.pop %v1048
        %v1050 = vadd.f32 %v987, 1.0
        %v1051 = vadd.f32 %v989, 1.0
        %v1052 = vadd.f32 %v991, 1.0
        %v1053 = vadd.f32 %v993, 1.0
        %v1054 = vadd.f32 %v995, 1.0
        %v1055 = vadd.f32 %v997, 1.0
        %v1056 = vadd.f32 %v999, 1.0
        %v1057 = vadd.f32 %v1001, 1.0
        %v1058 = vadd.f32 %v1003, 1.0
        %v1059 = vadd.f32 %v1005, 1.0
        %v1060 = vadd.f32 %v1007, 1.0
        %v1061 = vadd.f32 %v1009, 1.0
        %v1062 = vadd.f32 %v1011, 1.0
        %v1063 = vadd.f32 %v1013, 1.0
        %v1064 = vadd.f32 %v1015, 1.0
        %v1065 = vadd.f32 %v1017, 1.0
        %v1066 = vadd.f32 %v1019, 1.0
        %v1067 = vadd.f32 %v1021, 1.0
        %v1068 = vadd.f32 %v1023, 1.0
        %v1069 = vadd.f32 %v1025, 1.0
        %v1070 = vadd.f32 %v1027, 1.0
        %v1071 = vadd.f32 %v1029, 1.0
        %v1072 = vadd.f32 %v1031, 1.0
        %v1073 = vadd.f32 %v1033, 1.0
        %v1074 = vadd.f32 %v1035, 1.0
        %v1075 = vadd.f32 %v1037, 1.0
        %v1076 = vadd.f32 %v1039, 1.0
        %v1077 = vadd.f32 %v1041, 1.0
        %v1078 = vadd.f32 %v1043, 1.0
        %v1079 = vadd.f32 %v1045, 1.0
        %v1080 = vadd.f32 %v1047, 1.0
        %v1081 = vadd.f32 %v1049, 1.0
        %v1082 = vrcp.pop %v1050
        %v1083 = vmul.f32 1.0, %v1082
        %v1084 = vrcp.pop %v1051
        %v1085 = vmul.f32 1.0, %v1084
        %v1086 = vrcp.pop %v1052
        %v1087 = vmul.f32 1.0, %v1086
        %v1088 = vrcp.pop %v1053
        %v1089 = vmul.f32 1.0, %v1088
        %v1090 = vrcp.pop %v1054
        %v1091 = vmul.f32 1.0, %v1090
        %v1092 = vrcp.pop %v1055
        %v1093 = vmul.f32 1.0, %v1092
        %v1094 = vrcp.pop %v1056
        %v1095 = vmul.f32 1.0, %v1094
        %v1096 = vrcp.pop %v1057
        %v1097 = vmul.f32 1.0, %v1096
        %v1098 = vrcp.pop %v1058
        %v1099 = vmul.f32 1.0, %v1098
        %v1100 = vrcp.pop %v1059
        %v1101 = vmul.f32 1.0, %v1100
        %v1102 = vrcp.pop %v1060
        %v1103 = vmul.f32 1.0, %v1102
        %v1104 = vrcp.pop %v1061
        %v1105 = vmul.f32 1.0, %v1104
        %v1106 = vrcp.pop %v1062
        %v1107 = vmul.f32 1.0, %v1106
        %v1108 = vrcp.pop %v1063
        %v1109 = vmul.f32 1.0, %v1108
        %v1110 = vrcp.pop %v1064
        %v1111 = vmul.f32 1.0, %v1110
        %v1112 = vrcp.pop %v1065
        %v1113 = vmul.f32 1.0, %v1112
        %v1114 = vrcp.pop %v1066
        %v1115 = vmul.f32 1.0, %v1114
        %v1116 = vrcp.pop %v1067
        %v1117 = vmul.f32 1.0, %v1116
        %v1118 = vrcp.pop %v1068
        %v1119 = vmul.f32 1.0, %v1118
        %v1120 = vrcp.pop %v1069
        %v1121 = vmul.f32 1.0, %v1120
        %v1122 = vrcp.pop %v1070
        %v1123 = vmul.f32 1.0, %v1122
        %v1124 = vrcp.pop %v1071
        %v1125 = vmul.f32 1.0, %v1124
        %v1126 = vrcp.pop %v1072
        %v1127 = vmul.f32 1.0, %v1126
        %v1128 = vrcp.pop %v1073
        %v1129 = vmul.f32 1.0, %v1128
        %v1130 = vrcp.pop %v1074
        %v1131 = vmul.f32 1.0, %v1130
        %v1132 = vrcp.pop %v1075
        %v1133 = vmul.f32 1.0, %v1132
        %v1134 = vrcp.pop %v1076
        %v1135 = vmul.f32 1.0, %v1134
        %v1136 = vrcp.pop %v1077
        %v1137 = vmul.f32 1.0, %v1136
        %v1138 = vrcp.pop %v1078
        %v1139 = vmul.f32 1.0, %v1138
        %v1140 = vrcp.pop %v1079
        %v1141 = vmul.f32 1.0, %v1140
        %v1142 = vrcp.pop %v1080
        %v1143 = vmul.f32 1.0, %v1142
        %v1144 = vrcp.pop %v1081
        %v1145 = vmul.f32 1.0, %v1144
        %v1146 = vmul.f32 %v876, %v1083
        %v1147 = vmul.f32 %v878, %v1085
        %v1148 = vmul.f32 %v880, %v1087
        %v1149 = vmul.f32 %v882, %v1089
        %v1150 = vmul.f32 %v886, %v1091
        %v1151 = vmul.f32 %v888, %v1093
        %v1152 = vmul.f32 %v890, %v1095
        %v1153 = vmul.f32 %v892, %v1097
        %v1154 = vmul.f32 %v896, %v1099
        %v1155 = vmul.f32 %v898, %v1101
        %v1156 = vmul.f32 %v900, %v1103
        %v1157 = vmul.f32 %v902, %v1105
        %v1158 = vmul.f32 %v906, %v1107
        %v1159 = vmul.f32 %v908, %v1109
        %v1160 = vmul.f32 %v910, %v1111
        %v1161 = vmul.f32 %v912, %v1113
        %v1162 = vmul.f32 %v916, %v1115
        %v1163 = vmul.f32 %v918, %v1117
        %v1164 = vmul.f32 %v920, %v1119
        %v1165 = vmul.f32 %v922, %v1121
        %v1166 = vmul.f32 %v926, %v1123
        %v1167 = vmul.f32 %v928, %v1125
        %v1168 = vmul.f32 %v930, %v1127
        %v1169 = vmul.f32 %v932, %v1129
        %v1170 = vmul.f32 %v936, %v1131
        %v1171 = vmul.f32 %v938, %v1133
        %v1172 = vmul.f32 %v940, %v1135
        %v1173 = vmul.f32 %v942, %v1137
        %v1174 = vmul.f32 %v946, %v1139
        %v1175 = vmul.f32 %v948, %v1141
        %v1176 = vmul.f32 %v950, %v1143
        %v1177 = vmul.f32 %v952, %v1145
        %v1178 = vmul.f32 %v763, %v1146
        %v1179 = vmul.f32 %v765, %v1147
        %v1180 = vmul.f32 %v767, %v1148
        %v1181 = vmul.f32 %v769, %v1149
        %v1182 = vmul.f32 %v773, %v1150
        %v1183 = vmul.f32 %v775, %v1151
        %v1184 = vmul.f32 %v777, %v1152
        %v1185 = vmul.f32 %v779, %v1153
        %v1186 = vmul.f32 %v783, %v1154
        %v1187 = vmul.f32 %v785, %v1155
        %v1188 = vmul.f32 %v787, %v1156
        %v1189 = vmul.f32 %v789, %v1157
        %v1190 = vmul.f32 %v793, %v1158
        %v1191 = vmul.f32 %v795, %v1159
        %v1192 = vmul.f32 %v797, %v1160
        %v1193 = vmul.f32 %v799, %v1161
        %v1194 = vmul.f32 %v803, %v1162
        %v1195 = vmul.f32 %v805, %v1163
        %v1196 = vmul.f32 %v807, %v1164
        %v1197 = vmul.f32 %v809, %v1165
        %v1198 = vmul.f32 %v813, %v1166
        %v1199 = vmul.f32 %v815, %v1167
        %v1200 = vmul.f32 %v817, %v1168
        %v1201 = vmul.f32 %v819, %v1169
        %v1202 = vmul.f32 %v823, %v1170
        %v1203 = vmul.f32 %v825, %v1171
        %v1204 = vmul.f32 %v827, %v1172
        %v1205 = vmul.f32 %v829, %v1173
        %v1206 = vmul.f32 %v833, %v1174
        %v1207 = vmul.f32 %v835, %v1175
        %v1208 = vmul.f32 %v837, %v1176
        %v1209 = vmul.f32 %v839, %v1177
        %v1210 = vpack.c.bf16 %v1180, %v1178
        %v1211 = vpack.c.bf16 %v1181, %v1179
        %v1212 = vpack.c.bf16 %v1184, %v1182
        %v1213 = vpack.c.bf16 %v1185, %v1183
        %v1214 = vpack.c.bf16 %v1188, %v1186
        %v1215 = vpack.c.bf16 %v1189, %v1187
        %v1216 = vpack.c.bf16 %v1192, %v1190
        %v1217 = vpack.c.bf16 %v1193, %v1191
        %v1218 = vpack.c.bf16 %v1196, %v1194
        %v1219 = vpack.c.bf16 %v1197, %v1195
        %v1220 = vpack.c.bf16 %v1200, %v1198
        %v1221 = vpack.c.bf16 %v1201, %v1199
        %v1222 = vpack.c.bf16 %v1204, %v1202
        %v1223 = vpack.c.bf16 %v1205, %v1203
        %v1224 = vpack.c.bf16 %v1208, %v1206
        %v1225 = vpack.c.bf16 %v1209, %v1207
        %v1226 = vld [vmem:[#allocation7] sm:$0xf]
        %v1227 = vld [vmem:[#allocation7 + $0x4] sm:$0xf]
        %v1228 = vld [vmem:[#allocation7 + $0x8] sm:$0xf]
        %v1229 = vld [vmem:[#allocation7 + $0xc] sm:$0xf]
        %v1230 = vld [vmem:[#allocation7 + $0x10] sm:$0xf]
        %v1231 = vld [vmem:[#allocation7 + $0x14] sm:$0xf]
        %v1232 = vld [vmem:[#allocation7 + $0x18] sm:$0xf]
        %v1233 = vld [vmem:[#allocation7 + $0x1c] sm:$0xf]
        %v1234 = vld [vmem:[#allocation7 + $0x20] sm:$0xf]
        %v1235 = vld [vmem:[#allocation7 + $0x24] sm:$0xf]
        %v1236 = vld [vmem:[#allocation7 + $0x28] sm:$0xf]
        %v1237 = vld [vmem:[#allocation7 + $0x2c] sm:$0xf]
        %v1238 = vld [vmem:[#allocation7 + $0x30] sm:$0xf]
        %v1239 = vld [vmem:[#allocation7 + $0x34] sm:$0xf]
        %v1240 = vld [vmem:[#allocation7 + $0x38] sm:$0xf]
        %v1241 = vld [vmem:[#allocation7 + $0x3c] sm:$0xf]
        %v1242 = vld [vmem:[#allocation7 + $0x40] sm:$0xf]
        %v1243 = vld [vmem:[#allocation7 + $0x44] sm:$0xf]
        %v1244 = vld [vmem:[#allocation7 + $0x48] sm:$0xf]
        %v1245 = vld [vmem:[#allocation7 + $0x4c] sm:$0xf]
        %v1246 = vld [vmem:[#allocation7 + $0x50] sm:$0xf]
        %v1247 = vld [vmem:[#allocation7 + $0x54] sm:$0xf]
        %v1248 = vld [vmem:[#allocation7 + $0x58] sm:$0xf]
        %v1249 = vld [vmem:[#allocation7 + $0x5c] sm:$0xf]
        %v1250 = vld [vmem:[#allocation7 + $0x60] sm:$0xf]
        %v1251 = vld [vmem:[#allocation7 + $0x64] sm:$0xf]
        %v1252 = vld [vmem:[#allocation7 + $0x68] sm:$0xf]
        %v1253 = vld [vmem:[#allocation7 + $0x6c] sm:$0xf]
        %v1254 = vld [vmem:[#allocation7 + $0x70] sm:$0xf]
        %v1255 = vld [vmem:[#allocation7 + $0x74] sm:$0xf]
        %v1256 = vld [vmem:[#allocation7 + $0x78] sm:$0xf]
        %v1257 = vld [vmem:[#allocation7 + $0x7c] sm:$0xf]
        %v1290 = vunpack.c.l.b16 %v1226
        %v1291 = vunpack.c.l.b16 %v1227
        %v1292 = vunpack.c.l.b16 %v1228
        %v1293 = vunpack.c.l.b16 %v1229
        %v1294 = vunpack.c.l.b16 %v1230
        %v1295 = vunpack.c.l.b16 %v1231
        %v1296 = vunpack.c.l.b16 %v1232
        %v1297 = vunpack.c.l.b16 %v1233
        %v1298 = vunpack.c.l.b16 %v1234
        %v1299 = vunpack.c.l.b16 %v1235
        %v1300 = vunpack.c.l.b16 %v1236
        %v1301 = vunpack.c.l.b16 %v1237
        %v1302 = vunpack.c.l.b16 %v1238
        %v1303 = vunpack.c.l.b16 %v1239
        %v1304 = vunpack.c.l.b16 %v1240
        %v1305 = vunpack.c.l.b16 %v1241
        %v1306 = vunpack.c.l.b16 %v1242
        %v1307 = vunpack.c.l.b16 %v1243
        %v1308 = vunpack.c.l.b16 %v1244
        %v1309 = vunpack.c.l.b16 %v1245
        %v1310 = vunpack.c.l.b16 %v1246
        %v1311 = vunpack.c.l.b16 %v1247
        %v1312 = vunpack.c.l.b16 %v1248
        %v1313 = vunpack.c.l.b16 %v1249
        %v1314 = vunpack.c.l.b16 %v1250
        %v1315 = vunpack.c.l.b16 %v1251
        %v1316 = vunpack.c.l.b16 %v1252
        %v1317 = vunpack.c.l.b16 %v1253
        %v1318 = vunpack.c.l.b16 %v1254
        %v1319 = vunpack.c.l.b16 %v1255
        %v1320 = vunpack.c.l.b16 %v1256
        %v1321 = vunpack.c.l.b16 %v1257
        %v1322 = vpack.c.b16 %v1291, %v1290
        %v1323 = vpack.c.b16 %v1293, %v1292
        %v1324 = vpack.c.b16 %v1295, %v1294
        %v1325 = vpack.c.b16 %v1297, %v1296
        %v1326 = vpack.c.b16 %v1299, %v1298
        %v1327 = vpack.c.b16 %v1301, %v1300
        %v1328 = vpack.c.b16 %v1303, %v1302
        %v1329 = vpack.c.b16 %v1305, %v1304
        %v1330 = vpack.c.b16 %v1307, %v1306
        %v1331 = vpack.c.b16 %v1309, %v1308
        %v1332 = vpack.c.b16 %v1311, %v1310
        %v1333 = vpack.c.b16 %v1313, %v1312
        %v1334 = vpack.c.b16 %v1315, %v1314
        %v1335 = vpack.c.b16 %v1317, %v1316
        %v1336 = vpack.c.b16 %v1319, %v1318
        %v1337 = vpack.c.b16 %v1321, %v1320
        %1354 = vmatprep.subr.bf16.mxu0 0
        %1355 = vmatpush1.bf16.msra.mxu0 %v1322
        %1356 = vmatprep.subr.bf16.mxu0 0
        %1357 = vmatpush1.bf16.msra.mxu0 %v1323
        %1358 = vmatprep.subr.bf16.mxu0 0
        %1359 = vmatpush1.bf16.msra.mxu0 %v1324
        %1360 = vmatprep.subr.bf16.mxu0 0
        %1361 = vmatpush1.bf16.msra.mxu0 %v1325
        %1362 = vmatprep.subr.bf16.mxu0 0
        %1363 = vmatpush1.bf16.msra.mxu0 %v1326
        %1364 = vmatprep.subr.bf16.mxu0 0
        %1365 = vmatpush1.bf16.msra.mxu0 %v1327
        %1366 = vmatprep.subr.bf16.mxu0 0
        %1367 = vmatpush1.bf16.msra.mxu0 %v1328
        %1368 = vmatprep.subr.bf16.mxu0 0
        %1369 = vmatpush1.bf16.msra.mxu0 %v1329
        %1370 = vmatprep.subr.bf16.mxu0 0
        %1371 = vmatpush1.bf16.msra.mxu0 %v1330
        %1372 = vmatprep.subr.bf16.mxu0 0
        %1373 = vmatpush1.bf16.msra.mxu0 %v1331
        %1374 = vmatprep.subr.bf16.mxu0 0
        %1375 = vmatpush1.bf16.msra.mxu0 %v1332
        %1376 = vmatprep.subr.bf16.mxu0 0
        %1377 = vmatpush1.bf16.msra.mxu0 %v1333
        %1378 = vmatprep.subr.bf16.mxu0 0
        %1379 = vmatpush1.bf16.msra.mxu0 %v1334
        %1380 = vmatprep.subr.bf16.mxu0 0
        %1381 = vmatpush1.bf16.msra.mxu0 %v1335
        %1382 = vmatprep.subr.bf16.mxu0 0
        %1383 = vmatpush1.bf16.msra.mxu0 %v1336
        %1384 = vmatprep.subr.bf16.mxu0 0
        %1385 = vmatpush1.bf16.msra.mxu0 %v1337
        %1386 = vmatprep.mubr.bf16.mxu0 %v1211
        %1387 = vmatmul.mubr.bf16.gmra.mrb[0].mxu0 %v1210
        %v1388 = vpop.f32.mrb[0].mxu0
        %v1389 = vadd.f32 0.0, %v1388
        %v1390 = vpop.f32.mrb[0].mxu0
        %v1391 = vpop.f32.mrb[0].mxu0
        %v1392 = vadd.f32 0.0, %v1391
        %v1393 = vpop.f32.mrb[0].mxu0
        %1394 = vmatprep.mubr.bf16.mxu0 %v1213
        %1395 = vmatmul.mubr.bf16.gmra.mrb[0].mxu0 %v1212
        %v1396 = vpop.f32.mrb[0].mxu0
        %v1397 = vadd.f32 0.0, %v1396
        %v1398 = vpop.f32.mrb[0].mxu0
        %v1399 = vpop.f32.mrb[0].mxu0
        %v1400 = vadd.f32 0.0, %v1399
        %v1401 = vpop.f32.mrb[0].mxu0
        %1402 = vmatprep.mubr.bf16.mxu0 %v1215
        %1403 = vmatmul.mubr.bf16.gmra.mrb[0].mxu0 %v1214
        %v1404 = vpop.f32.mrb[0].mxu0
        %v1405 = vadd.f32 0.0, %v1404
        %v1406 = vpop.f32.mrb[0].mxu0
        %v1407 = vpop.f32.mrb[0].mxu0
        %v1408 = vadd.f32 0.0, %v1407
        %v1409 = vpop.f32.mrb[0].mxu0
        %1410 = vmatprep.mubr.bf16.mxu0 %v1217
        %1411 = vmatmul.mubr.bf16.gmra.mrb[0].mxu0 %v1216
        %v1412 = vpop.f32.mrb[0].mxu0
        %v1413 = vadd.f32 0.0, %v1412
        %v1414 = vpop.f32.mrb[0].mxu0
        %v1415 = vpop.f32.mrb[0].mxu0
        %v1416 = vadd.f32 0.0, %v1415
        %v1417 = vpop.f32.mrb[0].mxu0
        %1418 = vmatprep.mubr.bf16.mxu0 %v1219
        %1419 = vmatmul.mubr.bf16.gmra.mrb[0].mxu0 %v1218
        %v1420 = vpop.f32.mrb[0].mxu0
        %v1421 = vadd.f32 0.0, %v1420
        %v1422 = vpop.f32.mrb[0].mxu0
        %v1423 = vpop.f32.mrb[0].mxu0
        %v1424 = vadd.f32 0.0, %v1423
        %v1425 = vpop.f32.mrb[0].mxu0
        %1426 = vmatprep.mubr.bf16.mxu0 %v1221
        %1427 = vmatmul.mubr.bf16.gmra.mrb[0].mxu0 %v1220
        %v1428 = vpop.f32.mrb[0].mxu0
        %v1429 = vadd.f32 0.0, %v1428
        %v1430 = vpop.f32.mrb[0].mxu0
        %v1431 = vpop.f32.mrb[0].mxu0
        %v1432 = vadd.f32 0.0, %v1431
        %v1433 = vpop.f32.mrb[0].mxu0
        %1434 = vmatprep.mubr.bf16.mxu0 %v1223
        %1435 = vmatmul.mubr.bf16.gmra.mrb[0].mxu0 %v1222
        %v1436 = vpop.f32.mrb[0].mxu0
        %v1437 = vadd.f32 0.0, %v1436
        %v1438 = vpop.f32.mrb[0].mxu0
        %v1439 = vpop.f32.mrb[0].mxu0
        %v1440 = vadd.f32 0.0, %v1439
        %v1441 = vpop.f32.mrb[0].mxu0
        %1442 = vmatprep.mubr.bf16.mxu0 %v1225
        %1443 = vmatmul.mubr.bf16.gmra.mrb[0].mxu0 %v1224
        %v1444 = vpop.f32.mrb[0].mxu0
        %v1445 = vadd.f32 0.0, %v1444
        %v1446 = vpop.f32.mrb[0].mxu0
        %v1447 = vpop.f32.mrb[0].mxu0
        %v1448 = vadd.f32 0.0, %v1447
        %v1449 = vpop.f32.mrb[0].mxu0
        %1450 = vdwg.mxu0
        %1451 = vst [vmem:[%s277] sm:$0xff] %v1389
        %1452 = vst [vmem:[%s277 + $0x8] sm:$0xff] %v1392
        %1453 = vst [vmem:[%s277 + $0x10] sm:$0xff] %v1397
        %1454 = vst [vmem:[%s277 + $0x18] sm:$0xff] %v1400
        %1455 = vst [vmem:[%s277 + $0x20] sm:$0xff] %v1405
        %1456 = vst [vmem:[%s277 + $0x28] sm:$0xff] %v1408
        %1457 = vst [vmem:[%s277 + $0x30] sm:$0xff] %v1413
        %1458 = vst [vmem:[%s277 + $0x38] sm:$0xff] %v1416
        %1459 = vst [vmem:[%s277 + $0x40] sm:$0xff] %v1421
        %1460 = vst [vmem:[%s277 + $0x48] sm:$0xff] %v1424
        %1461 = vst [vmem:[%s277 + $0x50] sm:$0xff] %v1429
        %1462 = vst [vmem:[%s277 + $0x58] sm:$0xff] %v1432
        %1463 = vst [vmem:[%s277 + $0x60] sm:$0xff] %v1437
        %1464 = vst [vmem:[%s277 + $0x68] sm:$0xff] %v1440
        %1465 = vst [vmem:[%s277 + $0x70] sm:$0xff] %v1445
        %1466 = vst [vmem:[%s277 + $0x78] sm:$0xff] %v1448
        %s1467 = sand.u32 %s141, 1
        %s1468 = scalar_lea.sflag [#allocation4], %s1467
        %s1469 = sand.u32 %s141, 1
        %s1470 = smul.addr %s1469, 128
        %s1471 = scalar_lea.vmem [#allocation8], %s1470
        // Predicated region
        $region53: #{tpu_custom_call.1} parent=39 // pred_check
          %p1472 = pneg %p151
        $region54: #{tpu_custom_call.1} parent=39 // pred_check_branch
          %1474 = sbr.rel (%p1472) target = $region56
        $region55: #{tpu_custom_call.1} parent=39 // pred_region
          %s1475 = smul.u32 16, %s23
          %s1476 = ssub.s32 20, %s1475
          %p1477 = scmp.lt.s32.totalorder %s1476, 16
          %s1478 = scalar_select %p1477, %s1476, 16
          %s1479 = smul.u32 128, %s1478
          %s1481 = ssub.s32 2048, %s1479
          %1482 = vsyncadd %s1468, %s1481
          %p1483 = scmp.ne.s32.totalorder 0, %s1479
          %s1484 = smul.addr %s1475, 128
          %s1485 = scalar_lea.hbm %s5, %s1484
          %s1486 = smul.u32 8, %s1478
          %s1487 = sshll.u32 %s1471, 4
          %s1488 = int_to_ptr.vmem [resolvable:$true] %s1487
          %s1489 = sshll.u32 %s1486, 4
          %1493 = dma.vmem_to_hbm [thread:$0]  (%p1483), %s1488, %s1489, %s1485, %s1468, 128, 128, 8
        $region56: #{tpu_custom_call.1} parent=39 // pred_fallthru
          _
      $region40: #{tpu_custom_call.1} parent=5 // pred_fallthru
        _
      %p1494 = scmp.le.s32.totalorder 2, %s18
      // Predicated region
      $region57: #{tpu_custom_call.1} parent=5 // pred_check
        %p1495 = pneg %p1494
      $region58: #{tpu_custom_call.1} parent=5 // pred_check_branch
        %1497 = sbr.rel (%p1495) target = $region60
      $region59: #{tpu_custom_call.1} parent=5 // pred_region
        %s1498 = ssub.s32 %s18, 2
        // Predicated region
        $region61: #{tpu_custom_call.1} parent=59 // pred_check
          %p1499 = pneg %p157
        $region62: #{tpu_custom_call.1} parent=59 // pred_check_branch
          %1501 = sbr.rel (%p1499) target = $region64
        $region63: #{tpu_custom_call.1} parent=59 // pred_region
          %s1502 = sand.u32 %s142, 1
          %s1503 = scalar_lea.sflag [#allocation4], %s1502
          %s1504 = sand.u32 %s142, 1
          %s1505 = smul.addr %s1504, 128
          %s1506 = scalar_lea.vmem [#allocation8], %s1505
          %1507 = dma.done %s1503, 2048
        $region64: #{tpu_custom_call.1} parent=59 // pred_fallthru
          _
      $region60: #{tpu_custom_call.1} parent=5 // pred_fallthru
        _
    $region6: #{tpu_custom_call.1} parent=1 // loop_footer
      %s22 = sadd.s32 1, %s18
    $region7: #{tpu_custom_call.1} parent=1 // loop_footer_branch
      %17 = sbr.rel target = $region3
    $region8: #{tpu_custom_call.1} parent=1 // loop_exit
      _
    %1508 = vsyncpa [#allocation3], 1
    %s1509 = scalar_lea.sflag [#allocation3], 1
    %1510 = vsyncpa %s1509, 1
    %1511 = vsyncpa [#allocation6], 1
    %1512 = vsyncpa [#allocation4], 1
    %s1513 = scalar_lea.sflag [#allocation4], 1
    %1514 = vsyncpa %s1513, 1

</llo_original>
